<compile_context>
chip_gen: v7x
topology: tpu7x:2x2x1
jax: 0.10.0
libtpu: 0.0.40
codegen_flags: <defaults>
</compile_context>

<pallas_src>
import math

import jax
import jax.numpy as jnp
from jax.experimental import pallas as pl
from jax.experimental.pallas import tpu as pltpu


def _sigmoid(v):
    return 1.0 / (1.0 + jnp.exp(-v))


def grud_struct_kernel(
    meas_ref, mask_ref, delta_ref, xmean_ref,      # per-timestep inputs
    gxd_ref, gxb_ref, ghw_ref, ghb_ref,            # gamma_x (diag) / gamma_h
    wx_ref, wh_ref, wm_ref, bg_ref,                # stacked [z, r, h] gate weights
    fc1w_ref, fc1b_ref, fc2w_ref, fc2b_ref,        # classifier head
    out_ref,                                       # logits (B, Y)
    h_ref,                                         # VMEM scratch: hidden state (B, H)
):
    t = pl.program_id(0)

    @pl.when(t == 0)
    def _():
        h_ref[...] = jnp.zeros_like(h_ref)

    x_obs = meas_ref[...]      # (B, D): measurement (== x_last_obsv in this model)
    m = mask_ref[...]          # (B, D)
    delta = delta_ref[...]     # (B, D)
    x_mean = xmean_ref[...]    # (1, D), broadcast over batch
    h = h_ref[...]             # (B, H), f32

    # FilterLinear with eye() filter == diagonal scale + bias (pure VPU, no MXU).
    gx = delta * gxd_ref[...] + gxb_ref[...]
    delta_x = jnp.exp(-jnp.maximum(gx, 0.0))
    x = m * x_obs + (1.0 - m) * (delta_x * x_obs + (1.0 - delta_x) * x_mean)

    gh = jnp.dot(delta, ghw_ref[...], preferred_element_type=jnp.float32) + ghb_ref[...]
    delta_h = jnp.exp(-jnp.maximum(gh, 0.0))
    h = delta_h * h

    def gate(i, h_in):
        # pre-activation of gate i against comb = [x, h_in, mask]
        return (jnp.dot(x, wx_ref[i], preferred_element_type=jnp.float32)
                + jnp.dot(h_in, wh_ref[i], preferred_element_type=jnp.float32)
                + jnp.dot(m, wm_ref[i], preferred_element_type=jnp.float32)
                + bg_ref[i])

    z = _sigmoid(gate(0, h))
    r = _sigmoid(gate(1, h))
    h_tilde = jnp.tanh(gate(2, r * h))
    h_new = (1.0 - z) * h + z * h_tilde
    h_ref[...] = h_new

    @pl.when(t == pl.num_programs(0) - 1)
    def _():
        hid = jnp.tanh(
            jnp.dot(h_new, fc1w_ref[...], preferred_element_type=jnp.float32)
            + fc1b_ref[...])
        logits = (jnp.dot(hid, fc2w_ref[...], preferred_element_type=jnp.float32)
                  + fc2b_ref[...])
        out_ref[...] = logits.astype(out_ref.dtype)


def prepare_params(raw):
    """Parameter-only prep (done once per weight update, outside the call path)."""
    D = raw["gamma_x_w"].shape[0]
    H = raw["zl_w"].shape[0]
    Y = raw["fc2_w"].shape[0]

    # FilterLinear with eye() filter => effective weight is its diagonal.
    gx_diag = jnp.diagonal(raw["filter"] * raw["gamma_x_w"]).reshape(1, D)

    def split_t(w):            # w: (H, D+H+D); comb cat order is [x, h, mask]
        return w[:, :D].T, w[:, D:D + H].T, w[:, D + H:].T

    zx, zh, zm = split_t(raw["zl_w"])
    rx, rh, rm = split_t(raw["rl_w"])
    hx, hh, hm = split_t(raw["hl_w"])

    return dict(
        gx_diag=gx_diag,
        gx_b=raw["gamma_x_b"].reshape(1, D),
        gh_wt=raw["gamma_h_w"].T,
        gh_b=raw["gamma_h_b"].reshape(1, H),
        w_x=jnp.stack([zx, rx, hx]),          # (3, D, H)
        w_h=jnp.stack([zh, rh, hh]),          # (3, H, H)
        w_m=jnp.stack([zm, rm, hm]),          # (3, D, H)
        b_g=jnp.stack([raw["zl_b"].reshape(1, H),
                       raw["rl_b"].reshape(1, H),
                       raw["hl_b"].reshape(1, H)]),   # (3, 1, H)
        fc1_wt=raw["fc1_w"].T,
        fc1_b=raw["fc1_b"].reshape(1, H),
        fc2_wt=raw["fc2_w"].T,
        fc2_b=raw["fc2_b"].reshape(1, Y),
    )


def struct_classifier_forward(x_ts, prep, x_mean):
    """x_ts: (B, S, 3*D) interleaved [mask, measurement, time]; x_mean: (1, S, D)."""
    x = x_ts.astype(jnp.float32)
    B, S, C = x.shape
    D = C // 3
    H = prep["fc1_wt"].shape[0]
    Y = prep["fc2_wt"].shape[1]

    # Split interleaved channels; layout timestep-major so each grid step reads
    # a clean (B, D) tile.
    mask = jnp.transpose(x[:, :, 0::3], (1, 0, 2))     # (S, B, D)
    meas = jnp.transpose(x[:, :, 1::3], (1, 0, 2))     # (S, B, D)
    delta = jnp.transpose(x[:, :, 2::3], (1, 0, 2))    # (S, B, D)
    xmean_t = jnp.transpose(x_mean, (1, 0, 2))         # (S, 1, D)

    step_spec = pl.BlockSpec((None, B, D), lambda t: (t, 0, 0))
    mean_spec = pl.BlockSpec((None, 1, D), lambda t: (t, 0, 0))

    def const_spec(a):
        return pl.BlockSpec(a.shape, lambda t: (0,) * a.ndim)

    weights = [prep[k] for k in ("gx_diag", "gx_b", "gh_wt", "gh_b",
                                 "w_x", "w_h", "w_m", "b_g",
                                 "fc1_wt", "fc1_b", "fc2_wt", "fc2_b")]

    grid_spec = pltpu.PrefetchScalarGridSpec(
        num_scalar_prefetch=0,
        grid=(S,),
        in_specs=[step_spec, step_spec, step_spec, mean_spec]
                 + [const_spec(w) for w in weights],
        out_specs=pl.BlockSpec((B, Y), lambda t: (0, 0)),
        scratch_shapes=[pltpu.VMEM((B, H), jnp.float32)],
    )

    return pl.pallas_call(
        grud_struct_kernel,
        out_shape=jax.ShapeDtypeStruct((B, Y), jnp.float32),
        grid_spec=grid_spec,
        compiler_params=pltpu.CompilerParams(
            dimension_semantics=("arbitrary",)),   # sequential recurrence axis
    )(meas, mask, delta, xmean_t, *weights)


def struct_classifier_ref(x_ts, raw, x_mean):
    """Pure-JAX reference of the PyTorch forward pass (eval mode)."""
    x = x_ts.astype(jnp.float32)
    B, S, C = x.shape
    D = C // 3
    H = raw["zl_w"].shape[0]
    mask = x[:, :, 0::3]
    meas = x[:, :, 1::3]
    time = x[:, :, 2::3]
    w_gx = raw["filter"] * raw["gamma_x_w"]
    h = jnp.zeros((B, H), jnp.float32)
    for t in range(S):
        xt = meas[:, t]
        xl = meas[:, t]                      # x_last_obsv == measurement
        mt = mask[:, t]
        dt = time[:, t]
        xm = x_mean[0, t]
        delta_x = jnp.exp(-jnp.maximum(0.0, dt @ w_gx.T + raw["gamma_x_b"]))
        xg = mt * xt + (1.0 - mt) * (delta_x * xl + (1.0 - delta_x) * xm)
        delta_h = jnp.exp(-jnp.maximum(0.0, dt @ raw["gamma_h_w"].T + raw["gamma_h_b"]))
        h = delta_h * h
        comb = jnp.concatenate([xg, h, mt], axis=1)
        z = jax.nn.sigmoid(comb @ raw["zl_w"].T + raw["zl_b"])
        r = jax.nn.sigmoid(comb @ raw["rl_w"].T + raw["rl_b"])
        comb3 = jnp.concatenate([xg, r * h, mt], axis=1)
        h_tilde = jnp.tanh(comb3 @ raw["hl_w"].T + raw["hl_b"])
        h = (1.0 - z) * h + z * h_tilde
    hid = jnp.tanh(h @ raw["fc1_w"].T + raw["fc1_b"])
    return hid @ raw["fc2_w"].T + raw["fc2_b"]


if __name__ == "__main__":
    batch, seq, D, H, Y = 4, 6, 8, 32, 2

    key = jax.random.PRNGKey(0)
    keys = jax.random.split(key, 16)

    def lin_init(kw, kb, out_f, in_f):
        stdv = 1.0 / math.sqrt(in_f)
        w = jax.random.uniform(kw, (out_f, in_f), jnp.float32, -stdv, stdv)
        b = jax.random.uniform(kb, (out_f,), jnp.float32, -stdv, stdv)
        return w, b

    comb_size = D + H + D
    zl_w, zl_b = lin_init(keys[0], keys[1], H, comb_size)
    rl_w, rl_b = lin_init(keys[2], keys[3], H, comb_size)
    hl_w, hl_b = lin_init(keys[4], keys[5], H, comb_size)
    gamma_x_w, gamma_x_b = lin_init(keys[6], keys[7], D, D)
    gamma_h_w, gamma_h_b = lin_init(keys[8], keys[9], H, D)
    fc1_w, fc1_b = lin_init(keys[10], keys[11], H, H)
    fc2_w, fc2_b = lin_init(keys[12], keys[13], Y, H)

    raw = dict(
        filter=jnp.eye(D, dtype=jnp.float32),
        gamma_x_w=gamma_x_w, gamma_x_b=gamma_x_b,
        gamma_h_w=gamma_h_w, gamma_h_b=gamma_h_b,
        zl_w=zl_w, zl_b=zl_b, rl_w=rl_w, rl_b=rl_b, hl_w=hl_w, hl_b=hl_b,
        fc1_w=fc1_w, fc1_b=fc1_b, fc2_w=fc2_w, fc2_b=fc2_b,
    )

    x_ts = jax.random.normal(keys[14], (batch, seq, 3 * D), jnp.float32)
    x_mean = 0.5 + 0.1 * jax.random.normal(keys[15], (1, seq, D), jnp.float32)

    prep = prepare_params(raw)              # one-time, parameter-only prep
    logits = struct_classifier_forward(x_ts, prep, x_mean)
    logits = jax.block_until_ready(logits)

    logits_ref = struct_classifier_ref(x_ts, raw, x_mean)

    assert logits.shape == (batch, Y)
    max_err = jnp.max(jnp.abs(logits - logits_ref))
    assert jnp.allclose(logits, logits_ref, atol=5e-4, rtol=5e-4), (
        f"mismatch vs reference, max abs err = {max_err}")

    print("KERNEL_OK")
</pallas_src>

<mosaic_0001>
module attributes {stable_mosaic.version = 11 : i64} {
  func.func @grud_struct_kernel(%arg0: i32, %arg1: memref<1x4x8xf32, #tpu.memory_space<vmem>>, %arg2: memref<1x4x8xf32, #tpu.memory_space<vmem>>, %arg3: memref<1x4x8xf32, #tpu.memory_space<vmem>>, %arg4: memref<1x1x8xf32, #tpu.memory_space<vmem>>, %arg5: memref<1x8xf32, #tpu.memory_space<vmem>>, %arg6: memref<1x8xf32, #tpu.memory_space<vmem>>, %arg7: memref<8x32xf32, #tpu.memory_space<vmem>>, %arg8: memref<1x32xf32, #tpu.memory_space<vmem>>, %arg9: memref<3x8x32xf32, #tpu.memory_space<vmem>>, %arg10: memref<3x32x32xf32, #tpu.memory_space<vmem>>, %arg11: memref<3x8x32xf32, #tpu.memory_space<vmem>>, %arg12: memref<3x1x32xf32, #tpu.memory_space<vmem>>, %arg13: memref<32x32xf32, #tpu.memory_space<vmem>>, %arg14: memref<1x32xf32, #tpu.memory_space<vmem>>, %arg15: memref<32x2xf32, #tpu.memory_space<vmem>>, %arg16: memref<1x2xf32, #tpu.memory_space<vmem>>, %arg17: memref<4x2xf32, #tpu.memory_space<vmem>>, %arg18: memref<4x32xf32, #tpu.memory_space<vmem>>) attributes {dimension_semantics = [#tpu.dimension_semantics<arbitrary>], iteration_bounds = array<i64: 6>, scalar_prefetch = 0 : i64, scratch_operands = 1 : i64, tpu.core_type = #tpu.core_type<tc>, window_params = [{transform_indices = @transform_0, window_bounds = array<i64: 1, 4, 8>}, {transform_indices = @transform_1, window_bounds = array<i64: 1, 4, 8>}, {transform_indices = @transform_2, window_bounds = array<i64: 1, 4, 8>}, {transform_indices = @transform_3, window_bounds = array<i64: 1, 1, 8>}, {pipeline_mode = #tpu.pipeline_mode<synchronous>, transform_indices = @transform_4, window_bounds = array<i64: 1, 8>}, {pipeline_mode = #tpu.pipeline_mode<synchronous>, transform_indices = @transform_5, window_bounds = array<i64: 1, 8>}, {pipeline_mode = #tpu.pipeline_mode<synchronous>, transform_indices = @transform_6, window_bounds = array<i64: 8, 32>}, {pipeline_mode = #tpu.pipeline_mode<synchronous>, transform_indices = @transform_7, window_bounds = array<i64: 1, 32>}, {pipeline_mode = #tpu.pipeline_mode<synchronous>, transform_indices = @transform_8, window_bounds = array<i64: 3, 8, 32>}, {pipeline_mode = #tpu.pipeline_mode<synchronous>, transform_indices = @transform_9, window_bounds = array<i64: 3, 32, 32>}, {pipeline_mode = #tpu.pipeline_mode<synchronous>, transform_indices = @transform_10, window_bounds = array<i64: 3, 8, 32>}, {pipeline_mode = #tpu.pipeline_mode<synchronous>, transform_indices = @transform_11, window_bounds = array<i64: 3, 1, 32>}, {pipeline_mode = #tpu.pipeline_mode<synchronous>, transform_indices = @transform_12, window_bounds = array<i64: 32, 32>}, {pipeline_mode = #tpu.pipeline_mode<synchronous>, transform_indices = @transform_13, window_bounds = array<i64: 1, 32>}, {pipeline_mode = #tpu.pipeline_mode<synchronous>, transform_indices = @transform_14, window_bounds = array<i64: 32, 2>}, {pipeline_mode = #tpu.pipeline_mode<synchronous>, transform_indices = @transform_15, window_bounds = array<i64: 1, 2>}, {pipeline_mode = #tpu.pipeline_mode<synchronous>, transform_indices = @transform_16, window_bounds = array<i64: 4, 2>}]} {
    %c0_i32 = arith.constant 0 : i32
    %0 = arith.cmpi eq, %arg0, %c0_i32 : i32
    %1 = arith.extui %0 : i1 to i32
    %c0_i32_0 = arith.constant 0 : i32
    %2 = arith.cmpi ne, %1, %c0_i32_0 : i32
    scf.if %2 {
      %cst_81 = arith.constant 0.000000e+00 : f32
      %115 = vector.broadcast %cst_81 : f32 to vector<4x32xf32>
      %c0_82 = arith.constant 0 : index
      %c0_83 = arith.constant 0 : index
      %116 = vector.load %arg18[%c0_82, %c0_83] : memref<4x32xf32, #tpu.memory_space<vmem>>, vector<4x32xf32>
      tpu.vector_store %arg18[%c0_82, %c0_83], %115 {strides = array<i32>} : memref<4x32xf32, #tpu.memory_space<vmem>>, vector<4x32xf32>,
    } else {
    }
    %c0 = arith.constant 0 : index
    %c0_1 = arith.constant 0 : index
    %c0_2 = arith.constant 0 : index
    %3 = vector.load %arg1[%c0, %c0_1, %c0_2] : memref<1x4x8xf32, #tpu.memory_space<vmem>>, vector<1x4x8xf32>
    %4 = vector.shape_cast %3 : vector<1x4x8xf32> to vector<4x8xf32>
    %c0_3 = arith.constant 0 : index
    %c0_4 = arith.constant 0 : index
    %c0_5 = arith.constant 0 : index
    %5 = vector.load %arg2[%c0_3, %c0_4, %c0_5] : memref<1x4x8xf32, #tpu.memory_space<vmem>>, vector<1x4x8xf32>
    %6 = vector.shape_cast %5 : vector<1x4x8xf32> to vector<4x8xf32>
    %c0_6 = arith.constant 0 : index
    %c0_7 = arith.constant 0 : index
    %c0_8 = arith.constant 0 : index
    %7 = vector.load %arg3[%c0_6, %c0_7, %c0_8] : memref<1x4x8xf32, #tpu.memory_space<vmem>>, vector<1x4x8xf32>
    %8 = vector.shape_cast %7 : vector<1x4x8xf32> to vector<4x8xf32>
    %c0_9 = arith.constant 0 : index
    %c0_10 = arith.constant 0 : index
    %c0_11 = arith.constant 0 : index
    %9 = vector.load %arg4[%c0_9, %c0_10, %c0_11] : memref<1x1x8xf32, #tpu.memory_space<vmem>>, vector<1x1x8xf32>
    %10 = vector.shape_cast %9 : vector<1x1x8xf32> to vector<1x8xf32>
    %c0_12 = arith.constant 0 : index
    %c0_13 = arith.constant 0 : index
    %11 = vector.load %arg18[%c0_12, %c0_13] : memref<4x32xf32, #tpu.memory_space<vmem>>, vector<4x32xf32>
    %c0_14 = arith.constant 0 : index
    %c0_15 = arith.constant 0 : index
    %12 = vector.load %arg5[%c0_14, %c0_15] : memref<1x8xf32, #tpu.memory_space<vmem>>, vector<1x8xf32>
    %13 = vector.broadcast %12 : vector<1x8xf32> to vector<4x8xf32>
    %14 = arith.mulf %8, %13 : vector<4x8xf32>
    %c0_16 = arith.constant 0 : index
    %c0_17 = arith.constant 0 : index
    %15 = vector.load %arg6[%c0_16, %c0_17] : memref<1x8xf32, #tpu.memory_space<vmem>>, vector<1x8xf32>
    %16 = vector.broadcast %15 : vector<1x8xf32> to vector<4x8xf32>
    %17 = arith.addf %14, %16 : vector<4x8xf32>
    %cst = arith.constant 0.000000e+00 : f32
    %18 = vector.broadcast %cst : f32 to vector<4x8xf32>
    %19 = arith.maximumf %17, %18 : vector<4x8xf32>
    %cst_18 = arith.constant 0.000000e+00 : f32
    %20 = vector.broadcast %cst_18 : f32 to vector<4x8xf32>
    %21 = arith.subf %20, %19 : vector<4x8xf32>
    %22 = math.exp %21 : vector<4x8xf32>
    %23 = arith.mulf %6, %4 : vector<4x8xf32>
    %cst_19 = arith.constant 1.000000e+00 : f32
    %24 = vector.broadcast %cst_19 : f32 to vector<4x8xf32>
    %25 = arith.subf %24, %6 : vector<4x8xf32>
    %26 = arith.mulf %22, %4 : vector<4x8xf32>
    %cst_20 = arith.constant 1.000000e+00 : f32
    %27 = vector.broadcast %cst_20 : f32 to vector<4x8xf32>
    %28 = arith.subf %27, %22 : vector<4x8xf32>
    %29 = vector.broadcast %10 : vector<1x8xf32> to vector<4x8xf32>
    %30 = arith.mulf %28, %29 : vector<4x8xf32>
    %31 = arith.addf %26, %30 : vector<4x8xf32>
    %32 = arith.mulf %25, %31 : vector<4x8xf32>
    %33 = arith.addf %23, %32 : vector<4x8xf32>
    %c0_21 = arith.constant 0 : index
    %c0_22 = arith.constant 0 : index
    %34 = vector.load %arg7[%c0_21, %c0_22] : memref<8x32xf32, #tpu.memory_space<vmem>>, vector<8x32xf32>
    %cst_23 = arith.constant dense<0.000000e+00> : vector<4x32xf32>
    %35 = tpu.matmul %8, %34, %cst_23 {dimension_numbers = #tpu.dot_dimension_numbers<[1], [0], [0], [1], [0, 0, 1, 1], [], []>} : vector<4x8xf32>, vector<8x32xf32>, vector<4x32xf32> -> vector<4x32xf32>
    %c0_24 = arith.constant 0 : index
    %c0_25 = arith.constant 0 : index
    %36 = vector.load %arg8[%c0_24, %c0_25] : memref<1x32xf32, #tpu.memory_space<vmem>>, vector<1x32xf32>
    %37 = vector.broadcast %36 : vector<1x32xf32> to vector<4x32xf32>
    %38 = arith.addf %35, %37 : vector<4x32xf32>
    %cst_26 = arith.constant 0.000000e+00 : f32
    %39 = vector.broadcast %cst_26 : f32 to vector<4x32xf32>
    %40 = arith.maximumf %38, %39 : vector<4x32xf32>
    %cst_27 = arith.constant 0.000000e+00 : f32
    %41 = vector.broadcast %cst_27 : f32 to vector<4x32xf32>
    %42 = arith.subf %41, %40 : vector<4x32xf32>
    %43 = math.exp %42 : vector<4x32xf32>
    %44 = arith.mulf %43, %11 : vector<4x32xf32>
    %c0_28 = arith.constant 0 : index
    %c0_29 = arith.constant 0 : index
    %c0_30 = arith.constant 0 : index
    %45 = vector.load %arg9[%c0_28, %c0_29, %c0_30] : memref<3x8x32xf32, #tpu.memory_space<vmem>>, vector<1x8x32xf32>
    %46 = vector.shape_cast %45 : vector<1x8x32xf32> to vector<8x32xf32>
    %cst_31 = arith.constant dense<0.000000e+00> : vector<4x32xf32>
    %47 = tpu.matmul %33, %46, %cst_31 {dimension_numbers = #tpu.dot_dimension_numbers<[1], [0], [0], [1], [0, 0, 1, 1], [], []>} : vector<4x8xf32>, vector<8x32xf32>, vector<4x32xf32> -> vector<4x32xf32>
    %c0_32 = arith.constant 0 : index
    %c0_33 = arith.constant 0 : index
    %c0_34 = arith.constant 0 : index
    %48 = vector.load %arg10[%c0_32, %c0_33, %c0_34] : memref<3x32x32xf32, #tpu.memory_space<vmem>>, vector<1x32x32xf32>
    %49 = vector.shape_cast %48 : vector<1x32x32xf32> to vector<32x32xf32>
    %cst_35 = arith.constant dense<0.000000e+00> : vector<4x32xf32>
    %50 = tpu.matmul %44, %49, %cst_35 {dimension_numbers = #tpu.dot_dimension_numbers<[1], [0], [0], [1], [0, 0, 1, 1], [], []>} : vector<4x32xf32>, vector<32x32xf32>, vector<4x32xf32> -> vector<4x32xf32>
    %51 = arith.addf %47, %50 : vector<4x32xf32>
    %c0_36 = arith.constant 0 : index
    %c0_37 = arith.constant 0 : index
    %c0_38 = arith.constant 0 : index
    %52 = vector.load %arg11[%c0_36, %c0_37, %c0_38] : memref<3x8x32xf32, #tpu.memory_space<vmem>>, vector<1x8x32xf32>
    %53 = vector.shape_cast %52 : vector<1x8x32xf32> to vector<8x32xf32>
    %cst_39 = arith.constant dense<0.000000e+00> : vector<4x32xf32>
    %54 = tpu.matmul %6, %53, %cst_39 {dimension_numbers = #tpu.dot_dimension_numbers<[1], [0], [0], [1], [0, 0, 1, 1], [], []>} : vector<4x8xf32>, vector<8x32xf32>, vector<4x32xf32> -> vector<4x32xf32>
    %55 = arith.addf %51, %54 : vector<4x32xf32>
    %c0_40 = arith.constant 0 : index
    %c0_41 = arith.constant 0 : index
    %c0_42 = arith.constant 0 : index
    %56 = vector.load %arg12[%c0_40, %c0_41, %c0_42] : memref<3x1x32xf32, #tpu.memory_space<vmem>>, vector<1x1x32xf32>
    %57 = vector.shape_cast %56 : vector<1x1x32xf32> to vector<1x32xf32>
    %58 = vector.broadcast %57 : vector<1x32xf32> to vector<4x32xf32>
    %59 = arith.addf %55, %58 : vector<4x32xf32>
    %cst_43 = arith.constant 0.000000e+00 : f32
    %60 = vector.broadcast %cst_43 : f32 to vector<4x32xf32>
    %61 = arith.subf %60, %59 : vector<4x32xf32>
    %62 = math.exp %61 : vector<4x32xf32>
    %cst_44 = arith.constant 1.000000e+00 : f32
    %63 = vector.broadcast %cst_44 : f32 to vector<4x32xf32>
    %64 = arith.addf %63, %62 : vector<4x32xf32>
    %cst_45 = arith.constant 1.000000e+00 : f32
    %65 = vector.broadcast %cst_45 : f32 to vector<4x32xf32>
    %66 = arith.divf %65, %64 : vector<4x32xf32>
    %c1 = arith.constant 1 : index
    %c0_46 = arith.constant 0 : index
    %c0_47 = arith.constant 0 : index
    %67 = vector.load %arg9[%c1, %c0_46, %c0_47] : memref<3x8x32xf32, #tpu.memory_space<vmem>>, vector<1x8x32xf32>
    %68 = vector.shape_cast %67 : vector<1x8x32xf32> to vector<8x32xf32>
    %cst_48 = arith.constant dense<0.000000e+00> : vector<4x32xf32>
    %69 = tpu.matmul %33, %68, %cst_48 {dimension_numbers = #tpu.dot_dimension_numbers<[1], [0], [0], [1], [0, 0, 1, 1], [], []>} : vector<4x8xf32>, vector<8x32xf32>, vector<4x32xf32> -> vector<4x32xf32>
    %c1_49 = arith.constant 1 : index
    %c0_50 = arith.constant 0 : index
    %c0_51 = arith.constant 0 : index
    %70 = vector.load %arg10[%c1_49, %c0_50, %c0_51] : memref<3x32x32xf32, #tpu.memory_space<vmem>>, vector<1x32x32xf32>
    %71 = vector.shape_cast %70 : vector<1x32x32xf32> to vector<32x32xf32>
    %cst_52 = arith.constant dense<0.000000e+00> : vector<4x32xf32>
    %72 = tpu.matmul %44, %71, %cst_52 {dimension_numbers = #tpu.dot_dimension_numbers<[1], [0], [0], [1], [0, 0, 1, 1], [], []>} : vector<4x32xf32>, vector<32x32xf32>, vector<4x32xf32> -> vector<4x32xf32>
    %73 = arith.addf %69, %72 : vector<4x32xf32>
    %c1_53 = arith.constant 1 : index
    %c0_54 = arith.constant 0 : index
    %c0_55 = arith.constant 0 : index
    %74 = vector.load %arg11[%c1_53, %c0_54, %c0_55] : memref<3x8x32xf32, #tpu.memory_space<vmem>>, vector<1x8x32xf32>
    %75 = vector.shape_cast %74 : vector<1x8x32xf32> to vector<8x32xf32>
    %cst_56 = arith.constant dense<0.000000e+00> : vector<4x32xf32>
    %76 = tpu.matmul %6, %75, %cst_56 {dimension_numbers = #tpu.dot_dimension_numbers<[1], [0], [0], [1], [0, 0, 1, 1], [], []>} : vector<4x8xf32>, vector<8x32xf32>, vector<4x32xf32> -> vector<4x32xf32>
    %77 = arith.addf %73, %76 : vector<4x32xf32>
    %c1_57 = arith.constant 1 : index
    %c0_58 = arith.constant 0 : index
    %c0_59 = arith.constant 0 : index
    %78 = vector.load %arg12[%c1_57, %c0_58, %c0_59] : memref<3x1x32xf32, #tpu.memory_space<vmem>>, vector<1x1x32xf32>
    %79 = vector.shape_cast %78 : vector<1x1x32xf32> to vector<1x32xf32>
    %80 = vector.broadcast %79 : vector<1x32xf32> to vector<4x32xf32>
    %81 = arith.addf %77, %80 : vector<4x32xf32>
    %cst_60 = arith.constant 0.000000e+00 : f32
    %82 = vector.broadcast %cst_60 : f32 to vector<4x32xf32>
    %83 = arith.subf %82, %81 : vector<4x32xf32>
    %84 = math.exp %83 : vector<4x32xf32>
    %cst_61 = arith.constant 1.000000e+00 : f32
    %85 = vector.broadcast %cst_61 : f32 to vector<4x32xf32>
    %86 = arith.addf %85, %84 : vector<4x32xf32>
    %cst_62 = arith.constant 1.000000e+00 : f32
    %87 = vector.broadcast %cst_62 : f32 to vector<4x32xf32>
    %88 = arith.divf %87, %86 : vector<4x32xf32>
    %89 = arith.mulf %88, %44 : vector<4x32xf32>
    %c2 = arith.constant 2 : index
    %c0_63 = arith.constant 0 : index
    %c0_64 = arith.constant 0 : index
    %90 = vector.load %arg9[%c2, %c0_63, %c0_64] : memref<3x8x32xf32, #tpu.memory_space<vmem>>, vector<1x8x32xf32>
    %91 = vector.shape_cast %90 : vector<1x8x32xf32> to vector<8x32xf32>
    %cst_65 = arith.constant dense<0.000000e+00> : vector<4x32xf32>
    %92 = tpu.matmul %33, %91, %cst_65 {dimension_numbers = #tpu.dot_dimension_numbers<[1], [0], [0], [1], [0, 0, 1, 1], [], []>} : vector<4x8xf32>, vector<8x32xf32>, vector<4x32xf32> -> vector<4x32xf32>
    %c2_66 = arith.constant 2 : index
    %c0_67 = arith.constant 0 : index
    %c0_68 = arith.constant 0 : index
    %93 = vector.load %arg10[%c2_66, %c0_67, %c0_68] : memref<3x32x32xf32, #tpu.memory_space<vmem>>, vector<1x32x32xf32>
    %94 = vector.shape_cast %93 : vector<1x32x32xf32> to vector<32x32xf32>
    %cst_69 = arith.constant dense<0.000000e+00> : vector<4x32xf32>
    %95 = tpu.matmul %89, %94, %cst_69 {dimension_numbers = #tpu.dot_dimension_numbers<[1], [0], [0], [1], [0, 0, 1, 1], [], []>} : vector<4x32xf32>, vector<32x32xf32>, vector<4x32xf32> -> vector<4x32xf32>
    %96 = arith.addf %92, %95 : vector<4x32xf32>
    %c2_70 = arith.constant 2 : index
    %c0_71 = arith.constant 0 : index
    %c0_72 = arith.constant 0 : index
    %97 = vector.load %arg11[%c2_70, %c0_71, %c0_72] : memref<3x8x32xf32, #tpu.memory_space<vmem>>, vector<1x8x32xf32>
    %98 = vector.shape_cast %97 : vector<1x8x32xf32> to vector<8x32xf32>
    %cst_73 = arith.constant dense<0.000000e+00> : vector<4x32xf32>
    %99 = tpu.matmul %6, %98, %cst_73 {dimension_numbers = #tpu.dot_dimension_numbers<[1], [0], [0], [1], [0, 0, 1, 1], [], []>} : vector<4x8xf32>, vector<8x32xf32>, vector<4x32xf32> -> vector<4x32xf32>
    %100 = arith.addf %96, %99 : vector<4x32xf32>
    %c2_74 = arith.constant 2 : index
    %c0_75 = arith.constant 0 : index
    %c0_76 = arith.constant 0 : index
    %101 = vector.load %arg12[%c2_74, %c0_75, %c0_76] : memref<3x1x32xf32, #tpu.memory_space<vmem>>, vector<1x1x32xf32>
    %102 = vector.shape_cast %101 : vector<1x1x32xf32> to vector<1x32xf32>
    %103 = vector.broadcast %102 : vector<1x32xf32> to vector<4x32xf32>
    %104 = arith.addf %100, %103 : vector<4x32xf32>
    %105 = math.tanh %104 : vector<4x32xf32>
    %cst_77 = arith.constant 1.000000e+00 : f32
    %106 = vector.broadcast %cst_77 : f32 to vector<4x32xf32>
    %107 = arith.subf %106, %66 : vector<4x32xf32>
    %108 = arith.mulf %107, %44 : vector<4x32xf32>
    %109 = arith.mulf %66, %105 : vector<4x32xf32>
    %110 = arith.addf %108, %109 : vector<4x32xf32>
    %c0_78 = arith.constant 0 : index
    %c0_79 = arith.constant 0 : index
    %111 = vector.load %arg18[%c0_78, %c0_79] : memref<4x32xf32, #tpu.memory_space<vmem>>, vector<4x32xf32>
    tpu.vector_store %arg18[%c0_78, %c0_79], %110 {strides = array<i32>} : memref<4x32xf32, #tpu.memory_space<vmem>>, vector<4x32xf32>,
    %c5_i32 = arith.constant 5 : i32
    %112 = arith.cmpi eq, %arg0, %c5_i32 : i32
    %113 = arith.extui %112 : i1 to i32
    %c0_i32_80 = arith.constant 0 : i32
    %114 = arith.cmpi ne, %113, %c0_i32_80 : i32
    scf.if %114 {
      %c0_81 = arith.constant 0 : index
      %c0_82 = arith.constant 0 : index
      %115 = vector.load %arg13[%c0_81, %c0_82] : memref<32x32xf32, #tpu.memory_space<vmem>>, vector<32x32xf32>
      %cst_83 = arith.constant dense<0.000000e+00> : vector<4x32xf32>
      %116 = tpu.matmul %110, %115, %cst_83 {dimension_numbers = #tpu.dot_dimension_numbers<[1], [0], [0], [1], [0, 0, 1, 1], [], []>} : vector<4x32xf32>, vector<32x32xf32>, vector<4x32xf32> -> vector<4x32xf32>
      %c0_84 = arith.constant 0 : index
      %c0_85 = arith.constant 0 : index
      %117 = vector.load %arg14[%c0_84, %c0_85] : memref<1x32xf32, #tpu.memory_space<vmem>>, vector<1x32xf32>
      %118 = vector.broadcast %117 : vector<1x32xf32> to vector<4x32xf32>
      %119 = arith.addf %116, %118 : vector<4x32xf32>
      %120 = math.tanh %119 : vector<4x32xf32>
      %c0_86 = arith.constant 0 : index
      %c0_87 = arith.constant 0 : index
      %121 = vector.load %arg15[%c0_86, %c0_87] : memref<32x2xf32, #tpu.memory_space<vmem>>, vector<32x2xf32>
      %cst_88 = arith.constant dense<0.000000e+00> : vector<4x2xf32>
      %122 = tpu.matmul %120, %121, %cst_88 {dimension_numbers = #tpu.dot_dimension_numbers<[1], [0], [0], [1], [0, 0, 1, 1], [], []>} : vector<4x32xf32>, vector<32x2xf32>, vector<4x2xf32> -> vector<4x2xf32>
      %c0_89 = arith.constant 0 : index
      %c0_90 = arith.constant 0 : index
      %123 = vector.load %arg16[%c0_89, %c0_90] : memref<1x2xf32, #tpu.memory_space<vmem>>, vector<1x2xf32>
      %124 = vector.broadcast %123 : vector<1x2xf32> to vector<4x2xf32>
      %125 = arith.addf %122, %124 : vector<4x2xf32>
      %c0_91 = arith.constant 0 : index
      %c0_92 = arith.constant 0 : index
      %126 = vector.load %arg17[%c0_91, %c0_92] : memref<4x2xf32, #tpu.memory_space<vmem>>, vector<4x2xf32>
      tpu.vector_store %arg17[%c0_91, %c0_92], %125 {strides = array<i32>} : memref<4x2xf32, #tpu.memory_space<vmem>>, vector<4x2xf32>,
    } else {
    }
    return
  }
  func.func @transform_0(%arg0: i32) -> (i32, i32, i32) {
    %c0_i32 = arith.constant 0 : i32
    %c0_i32_0 = arith.constant 0 : i32
    %c0_i32_1 = arith.constant 0 : i32
    return %arg0, %c0_i32, %c0_i32_0 : i32, i32, i32
  }
  func.func @transform_1(%arg0: i32) -> (i32, i32, i32) {
    %c0_i32 = arith.constant 0 : i32
    %c0_i32_0 = arith.constant 0 : i32
    %c0_i32_1 = arith.constant 0 : i32
    return %arg0, %c0_i32, %c0_i32_0 : i32, i32, i32
  }
  func.func @transform_2(%arg0: i32) -> (i32, i32, i32) {
    %c0_i32 = arith.constant 0 : i32
    %c0_i32_0 = arith.constant 0 : i32
    %c0_i32_1 = arith.constant 0 : i32
    return %arg0, %c0_i32, %c0_i32_0 : i32, i32, i32
  }
  func.func @transform_3(%arg0: i32) -> (i32, i32, i32) {
    %c0_i32 = arith.constant 0 : i32
    %c0_i32_0 = arith.constant 0 : i32
    %c0_i32_1 = arith.constant 0 : i32
    return %arg0, %c0_i32, %c0_i32_0 : i32, i32, i32
  }
  func.func @transform_4(%arg0: i32) -> (i32, i32) {
    %c0_i32 = arith.constant 0 : i32
    %c0_i32_0 = arith.constant 0 : i32
    %c0_i32_1 = arith.constant 0 : i32
    return %c0_i32, %c0_i32_0 : i32, i32
  }
  func.func @transform_5(%arg0: i32) -> (i32, i32) {
    %c0_i32 = arith.constant 0 : i32
    %c0_i32_0 = arith.constant 0 : i32
    %c0_i32_1 = arith.constant 0 : i32
    return %c0_i32, %c0_i32_0 : i32, i32
  }
  func.func @transform_6(%arg0: i32) -> (i32, i32) {
    %c0_i32 = arith.constant 0 : i32
    %c0_i32_0 = arith.constant 0 : i32
    %c0_i32_1 = arith.constant 0 : i32
    return %c0_i32, %c0_i32_0 : i32, i32
  }
  func.func @transform_7(%arg0: i32) -> (i32, i32) {
    %c0_i32 = arith.constant 0 : i32
    %c0_i32_0 = arith.constant 0 : i32
    %c0_i32_1 = arith.constant 0 : i32
    return %c0_i32, %c0_i32_0 : i32, i32
  }
  func.func @transform_8(%arg0: i32) -> (i32, i32, i32) {
    %c0_i32 = arith.constant 0 : i32
    %c0_i32_0 = arith.constant 0 : i32
    %c0_i32_1 = arith.constant 0 : i32
    %c0_i32_2 = arith.constant 0 : i32
    return %c0_i32, %c0_i32_0, %c0_i32_1 : i32, i32, i32
  }
  func.func @transform_9(%arg0: i32) -> (i32, i32, i32) {
    %c0_i32 = arith.constant 0 : i32
    %c0_i32_0 = arith.constant 0 : i32
    %c0_i32_1 = arith.constant 0 : i32
    %c0_i32_2 = arith.constant 0 : i32
    return %c0_i32, %c0_i32_0, %c0_i32_1 : i32, i32, i32
  }
  func.func @transform_10(%arg0: i32) -> (i32, i32, i32) {
    %c0_i32 = arith.constant 0 : i32
    %c0_i32_0 = arith.constant 0 : i32
    %c0_i32_1 = arith.constant 0 : i32
    %c0_i32_2 = arith.constant 0 : i32
    return %c0_i32, %c0_i32_0, %c0_i32_1 : i32, i32, i32
  }
  func.func @transform_11(%arg0: i32) -> (i32, i32, i32) {
    %c0_i32 = arith.constant 0 : i32
    %c0_i32_0 = arith.constant 0 : i32
    %c0_i32_1 = arith.constant 0 : i32
    %c0_i32_2 = arith.constant 0 : i32
    return %c0_i32, %c0_i32_0, %c0_i32_1 : i32, i32, i32
  }
  func.func @transform_12(%arg0: i32) -> (i32, i32) {
    %c0_i32 = arith.constant 0 : i32
    %c0_i32_0 = arith.constant 0 : i32
    %c0_i32_1 = arith.constant 0 : i32
    return %c0_i32, %c0_i32_0 : i32, i32
  }
  func.func @transform_13(%arg0: i32) -> (i32, i32) {
    %c0_i32 = arith.constant 0 : i32
    %c0_i32_0 = arith.constant 0 : i32
    %c0_i32_1 = arith.constant 0 : i32
    return %c0_i32, %c0_i32_0 : i32, i32
  }
  func.func @transform_14(%arg0: i32) -> (i32, i32) {
    %c0_i32 = arith.constant 0 : i32
    %c0_i32_0 = arith.constant 0 : i32
    %c0_i32_1 = arith.constant 0 : i32
    return %c0_i32, %c0_i32_0 : i32, i32
  }
  func.func @transform_15(%arg0: i32) -> (i32, i32) {
    %c0_i32 = arith.constant 0 : i32
    %c0_i32_0 = arith.constant 0 : i32
    %c0_i32_1 = arith.constant 0 : i32
    return %c0_i32, %c0_i32_0 : i32, i32
  }
  func.func @transform_16(%arg0: i32) -> (i32, i32) {
    %c0_i32 = arith.constant 0 : i32
    %c0_i32_0 = arith.constant 0 : i32
    %c0_i32_1 = arith.constant 0 : i32
    return %c0_i32, %c0_i32_0 : i32, i32
  }
}

</mosaic_0001>

<llo_original>
// kernel: tpu_custom_call.1
$region0: #{tpu_custom_call.1}
  #allocation0 [shape = 'u32[]', space=smem, size = 0x4, offset = 0x4, fixed_abs, tag = 'smem constant byte address 0x4 - core index']
  #allocation1 [shape = 'u32[144,128]{1,0:T(1,128)}', space=vmem, size = 0x12000, scoped, tag = 'internal scratch']
  #allocation2 [shape = 'f32[4,32]{1,0:T(4,128)}', space=vmem, size = 0x800, scoped, tag = 'scratch operand']
  %s0 = inlined_call_operand.vmem [shape: f32[6,4,8], index: 0, kind: input, shape index: {}]
  %s1 = inlined_call_operand.hbm [shape: f32[6,4,8], index: 1, kind: input, shape index: {}]
  %s2 = inlined_call_operand.hbm [shape: f32[6,4,8], index: 2, kind: input, shape index: {}]
  %s3 = inlined_call_operand.hbm [shape: f32[6,1,8], index: 3, kind: input, shape index: {}]
  %s4 = inlined_call_operand.hbm [shape: f32[1,8], index: 4, kind: input, shape index: {}]
  %s5 = inlined_call_operand.hbm [shape: f32[1,8], index: 5, kind: input, shape index: {}]
  %s6 = inlined_call_operand.vmem [shape: f32[8,32], index: 6, kind: input, shape index: {}]
  %s7 = inlined_call_operand.hbm [shape: f32[1,32], index: 7, kind: input, shape index: {}]
  %s8 = inlined_call_operand.hbm [shape: f32[3,8,32], index: 8, kind: input, shape index: {}]
  %s9 = inlined_call_operand.hbm [shape: f32[3,32,32], index: 9, kind: input, shape index: {}]
  %s10 = inlined_call_operand.hbm [shape: f32[3,8,32], index: 10, kind: input, shape index: {}]
  %s11 = inlined_call_operand.vmem [shape: f32[3,1,32], index: 11, kind: input, shape index: {}]
  %s12 = inlined_call_operand.vmem [shape: f32[32,32], index: 12, kind: input, shape index: {}]
  %s13 = inlined_call_operand.vmem [shape: f32[1,32], index: 13, kind: input, shape index: {}]
  %s14 = inlined_call_operand.vmem [shape: f32[32,2], index: 14, kind: input, shape index: {}]
  %s15 = inlined_call_operand.vmem [shape: f32[1,2], index: 15, kind: input, shape index: {}]
  %s16 = inlined_call_operand.vmem [shape: f32[4,2], index: 16, kind: output, shape index: {}]
  %s17 = sld [smem:[#allocation0]]
  $region141: #{tpu_custom_call.1} parent=0
    _
  %s19 = ssub.s32 1, %s17
  %s20 = scalar_select 0, %s19, %s17
  $region1: #{tpu_custom_call.1} parent=0
    #allocation3 [shape = 'u8[4096]{0}', space=vmem, size = 0x1000, scoped, tag = 'input window, operand 1']
    #allocation4 [shape = 's32[2]{0}', space=sflag, size = 0x8, scoped, tag = 'scoped memory for tpu_custom_call.1']
    #allocation5 [shape = 'u8[4096]{0}', space=vmem, size = 0x1000, scoped, tag = 'input window, operand 2']
    #allocation6 [shape = 's32[2]{0}', space=sflag, size = 0x8, scoped, tag = 'scoped memory for tpu_custom_call.1']
    #allocation7 [shape = 'u8[1024]{0}', space=vmem, size = 0x400, scoped, tag = 'input window, operand 3']
    #allocation8 [shape = 'u8[512]{0}', space=vmem, size = 0x400, scoped, tag = 'input window, operand 4, single buffered']
    #allocation9 [shape = 's32[1]{0}', space=sflag, size = 0x4, scoped, tag = 'scoped memory for tpu_custom_call.1']
    #allocation10 [shape = 'u8[512]{0}', space=vmem, size = 0x400, scoped, tag = 'input window, operand 5, single buffered']
    #allocation11 [shape = 'u8[512]{0}', space=vmem, size = 0x400, scoped, tag = 'input window, operand 7, single buffered']
    #allocation12 [shape = 's32[1]{0}', space=sflag, size = 0x4, scoped, tag = 'scoped memory for tpu_custom_call.1']
    #allocation13 [shape = 'u8[12288]{0}', space=vmem, size = 0x3000, scoped, tag = 'input window, operand 8, single buffered']
    #allocation14 [shape = 'u8[49152]{0}', space=vmem, size = 0xc000, scoped, tag = 'input window, operand 9, single buffered']
    #allocation15 [shape = 's32[1]{0}', space=sflag, size = 0x4, scoped, tag = 'scoped memory for tpu_custom_call.1']
    #allocation16 [shape = 'u8[12288]{0}', space=vmem, size = 0x3000, scoped, tag = 'input window, operand 10, single buffered']
    %21 = vsyncpa [#allocation4], 0
    %s22 = scalar_lea.sflag [#allocation4], 1
    %23 = vsyncpa %s22, 0
    %24 = vsyncpa [#allocation6], 0
    %s25 = scalar_lea.sflag [#allocation6], 1
    %26 = vsyncpa %s25, 0
    %27 = vsyncpa [#allocation9], 0
    %28 = vsyncpa [#allocation12], 0
    %29 = vsyncpa [#allocation15], 0
    loop: start=0, step=1, limit=8
    $region2: #{tpu_custom_call.1} parent=1 // loop_pre_header
      _
    $region3: #{tpu_custom_call.1} parent=1 // loop_header
      %s31 = sphi 0, %s35
      %p32 = scmp.ge.s32.totalorder %s31, 8
      %s41 = sphi 0, %s43
      %s44 = sphi 0, %s41
      %s45 = sphi 0, %s44
      %s61 = sphi 0, %s45
      %s67 = sphi 0, %s69
      %s70 = sphi 0, %s67
      %s71 = sphi 0, %s70
      %s87 = sphi 0, %s71
      %s93 = sphi 0, %s95
      %s96 = sphi 0, %s93
      %s97 = sphi 0, %s96
      %s113 = sphi 0, %s97
      %s119 = sphi 0, %s121
      %s122 = sphi 0, %s119
      %s123 = sphi 0, %s122
      %s139 = sphi 0, %s123
      %s143 = sphi 0, %s143
      %s145 = sphi 0, %s143
      %s146 = sphi 0, %s145
      %s160 = sphi 0, %s146
      %s164 = sphi 0, %s164
      %s166 = sphi 0, %s164
      %s167 = sphi 0, %s166
      %s181 = sphi 0, %s167
      %s185 = sphi 0, %s185
      %s187 = sphi 0, %s185
      %s188 = sphi 0, %s187
      %s202 = sphi 0, %s188
      %s206 = sphi 0, %s206
      %s208 = sphi 0, %s206
      %s209 = sphi 0, %s208
      %s223 = sphi 0, %s209
      %s227 = sphi 0, %s227
      %s229 = sphi 0, %s227
      %s230 = sphi 0, %s229
      %s244 = sphi 0, %s230
      %s248 = sphi 0, %s248
      %s250 = sphi 0, %s248
      %s251 = sphi 0, %s250
      %s265 = sphi 0, %s251
      %s269 = sphi 0, %s269
      %s271 = sphi 0, %s269
      %s272 = sphi 0, %s271
      %s286 = sphi 0, %s272
      %s290 = sphi 0, %s290
      %s292 = sphi 0, %s290
      %s293 = sphi 0, %s292
      %s307 = sphi 0, %s293
      %s311 = sphi 0, %s311
      %s313 = sphi 0, %s311
      %s314 = sphi 0, %s313
      %s328 = sphi 0, %s314
      %s332 = sphi 0, %s332
      %s334 = sphi 0, %s332
      %s335 = sphi 0, %s334
      %s349 = sphi 0, %s335
      %s353 = sphi 0, %s353
      %s355 = sphi 0, %s353
      %s356 = sphi 0, %s355
      %s370 = sphi 0, %s356
      %s374 = sphi 0, %s374
      %s376 = sphi 0, %s374
      %s377 = sphi 0, %s376
      %s391 = sphi 0, %s377
      %s395 = sphi 0, %s395
      %s397 = sphi 0, %s395
      %s398 = sphi 0, %s397
      %s412 = sphi 0, %s398
    $region4: #{tpu_custom_call.1} parent=1 // loop_header_branch
      %34 = sbr.rel (%p32) target = $region8
    $region5: #{tpu_custom_call.1} parent=1 // loop_body
      %s36 = ssub.s32 %s31, 1
      %s37 = ssub.s32 %s31, 2
      %s38 = sadd.s32 %s31, 1
      %s39 = ssub.s32 %s31, %s38
      %p40 = scmp.eq.s32.totalorder %s39, 0
      %s42 = sadd.s32 %s41, 1
      %s43 = scalar_select %p40, %s41, %s42
      %p46 = pneg %p40
      %p47 = scmp.eq.s32.totalorder %s31, 5
      %p48 = por %p46, %p47
      %p49 = scmp.ne.s32.totalorder %s41, %s44
      %p50 = scmp.eq.s32.totalorder %s31, 0
      %p51 = por %p49, %p50
      %p52 = scmp.ne.s32.totalorder %s41, %s44
      %p53 = scmp.eq.s32.totalorder %s36, 5
      %p54 = por %p52, %p53
      %p55 = scmp.ne.s32.totalorder %s44, %s45
      %p56 = scmp.eq.s32.totalorder %s36, 0
      %p57 = por %p55, %p56
      %p58 = scmp.ne.s32.totalorder %s44, %s45
      %p59 = scmp.eq.s32.totalorder %s37, 5
      %p60 = por %p58, %p59
      %p62 = scmp.ne.s32.totalorder %s45, %s61
      %p63 = scmp.eq.s32.totalorder %s37, 0
      %p64 = por %p62, %p63
      %s65 = ssub.s32 %s31, %s38
      %p66 = scmp.eq.s32.totalorder %s65, 0
      %s68 = sadd.s32 %s67, 1
      %s69 = scalar_select %p66, %s67, %s68
      %p72 = pneg %p66
      %p73 = scmp.eq.s32.totalorder %s31, 5
      %p74 = por %p72, %p73
      %p75 = scmp.ne.s32.totalorder %s67, %s70
      %p76 = scmp.eq.s32.totalorder %s31, 0
      %p77 = por %p75, %p76
      %p78 = scmp.ne.s32.totalorder %s67, %s70
      %p79 = scmp.eq.s32.totalorder %s36, 5
      %p80 = por %p78, %p79
      %p81 = scmp.ne.s32.totalorder %s70, %s71
      %p82 = scmp.eq.s32.totalorder %s36, 0
      %p83 = por %p81, %p82
      %p84 = scmp.ne.s32.totalorder %s70, %s71
      %p85 = scmp.eq.s32.totalorder %s37, 5
      %p86 = por %p84, %p85
      %p88 = scmp.ne.s32.totalorder %s71, %s87
      %p89 = scmp.eq.s32.totalorder %s37, 0
      %p90 = por %p88, %p89
      %s91 = ssub.s32 %s31, %s38
      %p92 = scmp.eq.s32.totalorder %s91, 0
      %s94 = sadd.s32 %s93, 1
      %s95 = scalar_select %p92, %s93, %s94
      %p98 = pneg %p92
      %p99 = scmp.eq.s32.totalorder %s31, 5
      %p100 = por %p98, %p99
      %p101 = scmp.ne.s32.totalorder %s93, %s96
      %p102 = scmp.eq.s32.totalorder %s31, 0
      %p103 = por %p101, %p102
      %p104 = scmp.ne.s32.totalorder %s93, %s96
      %p105 = scmp.eq.s32.totalorder %s36, 5
      %p106 = por %p104, %p105
      %p107 = scmp.ne.s32.totalorder %s96, %s97
      %p108 = scmp.eq.s32.totalorder %s36, 0
      %p109 = por %p107, %p108
      %p110 = scmp.ne.s32.totalorder %s96, %s97
      %p111 = scmp.eq.s32.totalorder %s37, 5
      %p112 = por %p110, %p111
      %p114 = scmp.ne.s32.totalorder %s97, %s113
      %p115 = scmp.eq.s32.totalorder %s37, 0
      %p116 = por %p114, %p115
      %s117 = ssub.s32 %s31, %s38
      %p118 = scmp.eq.s32.totalorder %s117, 0
      %s120 = sadd.s32 %s119, 1
      %s121 = scalar_select %p118, %s119, %s120
      %p124 = pneg %p118
      %p125 = scmp.eq.s32.totalorder %s31, 5
      %p126 = por %p124, %p125
      %p127 = scmp.ne.s32.totalorder %s119, %s122
      %p128 = scmp.eq.s32.totalorder %s31, 0
      %p129 = por %p127, %p128
      %p130 = scmp.ne.s32.totalorder %s119, %s122
      %p131 = scmp.eq.s32.totalorder %s36, 5
      %p132 = por %p130, %p131
      %p133 = scmp.ne.s32.totalorder %s122, %s123
      %p134 = scmp.eq.s32.totalorder %s36, 0
      %p135 = por %p133, %p134
      %p136 = scmp.ne.s32.totalorder %s122, %s123
      %p137 = scmp.eq.s32.totalorder %s37, 5
      %p138 = por %p136, %p137
      %p140 = scmp.ne.s32.totalorder %s123, %s139
      %p141 = scmp.eq.s32.totalorder %s37, 0
      %p142 = por %p140, %p141
      %s144 = sadd.s32 %s143, 1
      %p147 = scmp.eq.s32.totalorder %s31, 5
      %p148 = scmp.ne.s32.totalorder %s143, %s145
      %p149 = scmp.eq.s32.totalorder %s31, 0
      %p150 = por %p148, %p149
      %p151 = scmp.ne.s32.totalorder %s143, %s145
      %p152 = scmp.eq.s32.totalorder %s36, 5
      %p153 = por %p151, %p152
      %p154 = scmp.ne.s32.totalorder %s145, %s146
      %p155 = scmp.eq.s32.totalorder %s36, 0
      %p156 = por %p154, %p155
      %p157 = scmp.ne.s32.totalorder %s145, %s146
      %p158 = scmp.eq.s32.totalorder %s37, 5
      %p159 = por %p157, %p158
      %p161 = scmp.ne.s32.totalorder %s146, %s160
      %p162 = scmp.eq.s32.totalorder %s37, 0
      %p163 = por %p161, %p162
      %s165 = sadd.s32 %s164, 1
      %p168 = scmp.eq.s32.totalorder %s31, 5
      %p169 = scmp.ne.s32.totalorder %s164, %s166
      %p170 = scmp.eq.s32.totalorder %s31, 0
      %p171 = por %p169, %p170
      %p172 = scmp.ne.s32.totalorder %s164, %s166
      %p173 = scmp.eq.s32.totalorder %s36, 5
      %p174 = por %p172, %p173
      %p175 = scmp.ne.s32.totalorder %s166, %s167
      %p176 = scmp.eq.s32.totalorder %s36, 0
      %p177 = por %p175, %p176
      %p178 = scmp.ne.s32.totalorder %s166, %s167
      %p179 = scmp.eq.s32.totalorder %s37, 5
      %p180 = por %p178, %p179
      %p182 = scmp.ne.s32.totalorder %s167, %s181
      %p183 = scmp.eq.s32.totalorder %s37, 0
      %p184 = por %p182, %p183
      %s186 = sadd.s32 %s185, 1
      %p189 = scmp.eq.s32.totalorder %s31, 5
      %p190 = scmp.ne.s32.totalorder %s185, %s187
      %p191 = scmp.eq.s32.totalorder %s31, 0
      %p192 = por %p190, %p191
      %p193 = scmp.ne.s32.totalorder %s185, %s187
      %p194 = scmp.eq.s32.totalorder %s36, 5
      %p195 = por %p193, %p194
      %p196 = scmp.ne.s32.totalorder %s187, %s188
      %p197 = scmp.eq.s32.totalorder %s36, 0
      %p198 = por %p196, %p197
      %p199 = scmp.ne.s32.totalorder %s187, %s188
      %p200 = scmp.eq.s32.totalorder %s37, 5
      %p201 = por %p199, %p200
      %p203 = scmp.ne.s32.totalorder %s188, %s202
      %p204 = scmp.eq.s32.totalorder %s37, 0
      %p205 = por %p203, %p204
      %s207 = sadd.s32 %s206, 1
      %p210 = scmp.eq.s32.totalorder %s31, 5
      %p211 = scmp.ne.s32.totalorder %s206, %s208
      %p212 = scmp.eq.s32.totalorder %s31, 0
      %p213 = por %p211, %p212
      %p214 = scmp.ne.s32.totalorder %s206, %s208
      %p215 = scmp.eq.s32.totalorder %s36, 5
      %p216 = por %p214, %p215
      %p217 = scmp.ne.s32.totalorder %s208, %s209
      %p218 = scmp.eq.s32.totalorder %s36, 0
      %p219 = por %p217, %p218
      %p220 = scmp.ne.s32.totalorder %s208, %s209
      %p221 = scmp.eq.s32.totalorder %s37, 5
      %p222 = por %p220, %p221
      %p224 = scmp.ne.s32.totalorder %s209, %s223
      %p225 = scmp.eq.s32.totalorder %s37, 0
      %p226 = por %p224, %p225
      %s228 = sadd.s32 %s227, 1
      %p231 = scmp.eq.s32.totalorder %s31, 5
      %p232 = scmp.ne.s32.totalorder %s227, %s229
      %p233 = scmp.eq.s32.totalorder %s31, 0
      %p234 = por %p232, %p233
      %p235 = scmp.ne.s32.totalorder %s227, %s229
      %p236 = scmp.eq.s32.totalorder %s36, 5
      %p237 = por %p235, %p236
      %p238 = scmp.ne.s32.totalorder %s229, %s230
      %p239 = scmp.eq.s32.totalorder %s36, 0
      %p240 = por %p238, %p239
      %p241 = scmp.ne.s32.totalorder %s229, %s230
      %p242 = scmp.eq.s32.totalorder %s37, 5
      %p243 = por %p241, %p242
      %p245 = scmp.ne.s32.totalorder %s230, %s244
      %p246 = scmp.eq.s32.totalorder %s37, 0
      %p247 = por %p245, %p246
      %s249 = sadd.s32 %s248, 1
      %p252 = scmp.eq.s32.totalorder %s31, 5
      %p253 = scmp.ne.s32.totalorder %s248, %s250
      %p254 = scmp.eq.s32.totalorder %s31, 0
      %p255 = por %p253, %p254
      %p256 = scmp.ne.s32.totalorder %s248, %s250
      %p257 = scmp.eq.s32.totalorder %s36, 5
      %p258 = por %p256, %p257
      %p259 = scmp.ne.s32.totalorder %s250, %s251
      %p260 = scmp.eq.s32.totalorder %s36, 0
      %p261 = por %p259, %p260
      %p262 = scmp.ne.s32.totalorder %s250, %s251
      %p263 = scmp.eq.s32.totalorder %s37, 5
      %p264 = por %p262, %p263
      %p266 = scmp.ne.s32.totalorder %s251, %s265
      %p267 = scmp.eq.s32.totalorder %s37, 0
      %p268 = por %p266, %p267
      %s270 = sadd.s32 %s269, 1
      %p273 = scmp.eq.s32.totalorder %s31, 5
      %p274 = scmp.ne.s32.totalorder %s269, %s271
      %p275 = scmp.eq.s32.totalorder %s31, 0
      %p276 = por %p274, %p275
      %p277 = scmp.ne.s32.totalorder %s269, %s271
      %p278 = scmp.eq.s32.totalorder %s36, 5
      %p279 = por %p277, %p278
      %p280 = scmp.ne.s32.totalorder %s271, %s272
      %p281 = scmp.eq.s32.totalorder %s36, 0
      %p282 = por %p280, %p281
      %p283 = scmp.ne.s32.totalorder %s271, %s272
      %p284 = scmp.eq.s32.totalorder %s37, 5
      %p285 = por %p283, %p284
      %p287 = scmp.ne.s32.totalorder %s272, %s286
      %p288 = scmp.eq.s32.totalorder %s37, 0
      %p289 = por %p287, %p288
      %s291 = sadd.s32 %s290, 1
      %p294 = scmp.eq.s32.totalorder %s31, 5
      %p295 = scmp.ne.s32.totalorder %s290, %s292
      %p296 = scmp.eq.s32.totalorder %s31, 0
      %p297 = por %p295, %p296
      %p298 = scmp.ne.s32.totalorder %s290, %s292
      %p299 = scmp.eq.s32.totalorder %s36, 5
      %p300 = por %p298, %p299
      %p301 = scmp.ne.s32.totalorder %s292, %s293
      %p302 = scmp.eq.s32.totalorder %s36, 0
      %p303 = por %p301, %p302
      %p304 = scmp.ne.s32.totalorder %s292, %s293
      %p305 = scmp.eq.s32.totalorder %s37, 5
      %p306 = por %p304, %p305
      %p308 = scmp.ne.s32.totalorder %s293, %s307
      %p309 = scmp.eq.s32.totalorder %s37, 0
      %p310 = por %p308, %p309
      %s312 = sadd.s32 %s311, 1
      %p315 = scmp.eq.s32.totalorder %s31, 5
      %p316 = scmp.ne.s32.totalorder %s311, %s313
      %p317 = scmp.eq.s32.totalorder %s31, 0
      %p318 = por %p316, %p317
      %p319 = scmp.ne.s32.totalorder %s311, %s313
      %p320 = scmp.eq.s32.totalorder %s36, 5
      %p321 = por %p319, %p320
      %p322 = scmp.ne.s32.totalorder %s313, %s314
      %p323 = scmp.eq.s32.totalorder %s36, 0
      %p324 = por %p322, %p323
      %p325 = scmp.ne.s32.totalorder %s313, %s314
      %p326 = scmp.eq.s32.totalorder %s37, 5
      %p327 = por %p325, %p326
      %p329 = scmp.ne.s32.totalorder %s314, %s328
      %p330 = scmp.eq.s32.totalorder %s37, 0
      %p331 = por %p329, %p330
      %s333 = sadd.s32 %s332, 1
      %p336 = scmp.eq.s32.totalorder %s31, 5
      %p337 = scmp.ne.s32.totalorder %s332, %s334
      %p338 = scmp.eq.s32.totalorder %s31, 0
      %p339 = por %p337, %p338
      %p340 = scmp.ne.s32.totalorder %s332, %s334
      %p341 = scmp.eq.s32.totalorder %s36, 5
      %p342 = por %p340, %p341
      %p343 = scmp.ne.s32.totalorder %s334, %s335
      %p344 = scmp.eq.s32.totalorder %s36, 0
      %p345 = por %p343, %p344
      %p346 = scmp.ne.s32.totalorder %s334, %s335
      %p347 = scmp.eq.s32.totalorder %s37, 5
      %p348 = por %p346, %p347
      %p350 = scmp.ne.s32.totalorder %s335, %s349
      %p351 = scmp.eq.s32.totalorder %s37, 0
      %p352 = por %p350, %p351
      %s354 = sadd.s32 %s353, 1
      %p357 = scmp.eq.s32.totalorder %s31, 5
      %p358 = scmp.ne.s32.totalorder %s353, %s355
      %p359 = scmp.eq.s32.totalorder %s31, 0
      %p360 = por %p358, %p359
      %p361 = scmp.ne.s32.totalorder %s353, %s355
      %p362 = scmp.eq.s32.totalorder %s36, 5
      %p363 = por %p361, %p362
      %p364 = scmp.ne.s32.totalorder %s355, %s356
      %p365 = scmp.eq.s32.totalorder %s36, 0
      %p366 = por %p364, %p365
      %p367 = scmp.ne.s32.totalorder %s355, %s356
      %p368 = scmp.eq.s32.totalorder %s37, 5
      %p369 = por %p367, %p368
      %p371 = scmp.ne.s32.totalorder %s356, %s370
      %p372 = scmp.eq.s32.totalorder %s37, 0
      %p373 = por %p371, %p372
      %s375 = sadd.s32 %s374, 1
      %p378 = scmp.eq.s32.totalorder %s31, 5
      %p379 = scmp.ne.s32.totalorder %s374, %s376
      %p380 = scmp.eq.s32.totalorder %s31, 0
      %p381 = por %p379, %p380
      %p382 = scmp.ne.s32.totalorder %s374, %s376
      %p383 = scmp.eq.s32.totalorder %s36, 5
      %p384 = por %p382, %p383
      %p385 = scmp.ne.s32.totalorder %s376, %s377
      %p386 = scmp.eq.s32.totalorder %s36, 0
      %p387 = por %p385, %p386
      %p388 = scmp.ne.s32.totalorder %s376, %s377
      %p389 = scmp.eq.s32.totalorder %s37, 5
      %p390 = por %p388, %p389
      %p392 = scmp.ne.s32.totalorder %s377, %s391
      %p393 = scmp.eq.s32.totalorder %s37, 0
      %p394 = por %p392, %p393
      %s396 = sadd.s32 %s395, 1
      %p399 = scmp.eq.s32.totalorder %s31, 5
      %p400 = scmp.ne.s32.totalorder %s395, %s397
      %p401 = scmp.eq.s32.totalorder %s31, 0
      %p402 = por %p400, %p401
      %p403 = scmp.ne.s32.totalorder %s395, %s397
      %p404 = scmp.eq.s32.totalorder %s36, 5
      %p405 = por %p403, %p404
      %p406 = scmp.ne.s32.totalorder %s397, %s398
      %p407 = scmp.eq.s32.totalorder %s36, 0
      %p408 = por %p406, %p407
      %p409 = scmp.ne.s32.totalorder %s397, %s398
      %p410 = scmp.eq.s32.totalorder %s37, 5
      %p411 = por %p409, %p410
      %p413 = scmp.ne.s32.totalorder %s398, %s412
      %p414 = scmp.eq.s32.totalorder %s37, 0
      %p415 = por %p413, %p414
      %p416 = scmp.le.s32.totalorder 1, %s31
      %p417 = scmp.lt.s32.totalorder %s31, 7
      %p418 = pnand %p416, %p417
      %p419 = pneg %p418
      // Predicated region
      $region9: #{tpu_custom_call.1} parent=5 // pred_check
        _
      $region10: #{tpu_custom_call.1} parent=5 // pred_check_branch
        %421 = sbr.rel (%p418) target = $region12
      $region11: #{tpu_custom_call.1} parent=5 // pred_region
        %s422 = ssub.s32 %s31, 1
        // Predicated region
        $region13: #{tpu_custom_call.1} parent=11 // pred_check
          %p423 = pneg %p156
        $region14: #{tpu_custom_call.1} parent=11 // pred_check_branch
          %425 = sbr.rel (%p423) target = $region16
        $region15: #{tpu_custom_call.1} parent=11 // pred_region
          %s427 = ssub.s32 16, 16
          %428 = vsyncadd [#allocation9], %s427
          %s430 = sshll.u32 [#allocation8], 4
          %s431 = int_to_ptr.vmem [resolvable:$true] %s430
          %433 = dma.hbm_to_vmem [thread:$0]  %s4, 16, %s431, [#allocation9]
        $region16: #{tpu_custom_call.1} parent=11 // pred_fallthru
          _
        // Predicated region
        $region17: #{tpu_custom_call.1} parent=11 // pred_check
          %p434 = pneg %p177
        $region18: #{tpu_custom_call.1} parent=11 // pred_check_branch
          %436 = sbr.rel (%p434) target = $region20
        $region19: #{tpu_custom_call.1} parent=11 // pred_region
          %s438 = ssub.s32 16, 16
          %439 = vsyncadd [#allocation9], %s438
          %s441 = sshll.u32 [#allocation10], 4
          %s442 = int_to_ptr.vmem [resolvable:$true] %s441
          %444 = dma.hbm_to_vmem [thread:$0]  %s5, 16, %s442, [#allocation9]
        $region20: #{tpu_custom_call.1} parent=11 // pred_fallthru
          _
        // Predicated region
        $region21: #{tpu_custom_call.1} parent=11 // pred_check
          %p445 = pneg %p198
        $region22: #{tpu_custom_call.1} parent=11 // pred_check_branch
          %447 = sbr.rel (%p445) target = $region24
        $region23: #{tpu_custom_call.1} parent=11 // pred_region
          _
        $region24: #{tpu_custom_call.1} parent=11 // pred_fallthru
          _
        // Predicated region
        $region25: #{tpu_custom_call.1} parent=11 // pred_check
          %p448 = pneg %p219
        $region26: #{tpu_custom_call.1} parent=11 // pred_check_branch
          %450 = sbr.rel (%p448) target = $region28
        $region27: #{tpu_custom_call.1} parent=11 // pred_region
          %s452 = ssub.s32 16, 16
          %453 = vsyncadd [#allocation12], %s452
          %s455 = sshll.u32 [#allocation11], 4
          %s456 = int_to_ptr.vmem [resolvable:$true] %s455
          %458 = dma.hbm_to_vmem [thread:$0]  %s7, 16, %s456, [#allocation12]
        $region28: #{tpu_custom_call.1} parent=11 // pred_fallthru
          _
        // Predicated region
        $region29: #{tpu_custom_call.1} parent=11 // pred_check
          %p459 = pneg %p240
        $region30: #{tpu_custom_call.1} parent=11 // pred_check_branch
          %461 = sbr.rel (%p459) target = $region32
        $region31: #{tpu_custom_call.1} parent=11 // pred_region
          %s463 = ssub.s32 384, 384
          %464 = vsyncadd [#allocation12], %s463
          %s465 = sshll.u32 [#allocation13], 4
          %s466 = int_to_ptr.vmem [resolvable:$true] %s465
          %471 = dma.hbm_to_vmem [thread:$0]  %s8, 384, %s466, [#allocation12], 128, 128, 8
        $region32: #{tpu_custom_call.1} parent=11 // pred_fallthru
          _
        // Predicated region
        $region33: #{tpu_custom_call.1} parent=11 // pred_check
          %p472 = pneg %p261
        $region34: #{tpu_custom_call.1} parent=11 // pred_check_branch
          %474 = sbr.rel (%p472) target = $region36
        $region35: #{tpu_custom_call.1} parent=11 // pred_region
          %s476 = ssub.s32 1536, 1536
          %477 = vsyncadd [#allocation15], %s476
          %s478 = sshll.u32 [#allocation14], 4
          %s479 = int_to_ptr.vmem [resolvable:$true] %s478
          %484 = dma.hbm_to_vmem [thread:$0]  %s9, 1536, %s479, [#allocation15], 128, 128, 8
        $region36: #{tpu_custom_call.1} parent=11 // pred_fallthru
          _
        // Predicated region
        $region37: #{tpu_custom_call.1} parent=11 // pred_check
          %p485 = pneg %p282
        $region38: #{tpu_custom_call.1} parent=11 // pred_check_branch
          %487 = sbr.rel (%p485) target = $region40
        $region39: #{tpu_custom_call.1} parent=11 // pred_region
          %s489 = ssub.s32 384, 384
          %490 = vsyncadd [#allocation15], %s489
          %s491 = sshll.u32 [#allocation16], 4
          %s492 = int_to_ptr.vmem [resolvable:$true] %s491
          %497 = dma.hbm_to_vmem [thread:$0]  %s10, 384, %s492, [#allocation15], 128, 128, 8
        $region40: #{tpu_custom_call.1} parent=11 // pred_fallthru
          _
        // Predicated region
        $region41: #{tpu_custom_call.1} parent=11 // pred_check
          %p498 = pneg %p303
        $region42: #{tpu_custom_call.1} parent=11 // pred_check_branch
          %500 = sbr.rel (%p498) target = $region44
        $region43: #{tpu_custom_call.1} parent=11 // pred_region
          _
        $region44: #{tpu_custom_call.1} parent=11 // pred_fallthru
          _
        // Predicated region
        $region45: #{tpu_custom_call.1} parent=11 // pred_check
          %p501 = pneg %p324
        $region46: #{tpu_custom_call.1} parent=11 // pred_check_branch
          %503 = sbr.rel (%p501) target = $region48
        $region47: #{tpu_custom_call.1} parent=11 // pred_region
          _
        $region48: #{tpu_custom_call.1} parent=11 // pred_fallthru
          _
        // Predicated region
        $region49: #{tpu_custom_call.1} parent=11 // pred_check
          %p504 = pneg %p345
        $region50: #{tpu_custom_call.1} parent=11 // pred_check_branch
          %506 = sbr.rel (%p504) target = $region52
        $region51: #{tpu_custom_call.1} parent=11 // pred_region
          _
        $region52: #{tpu_custom_call.1} parent=11 // pred_fallthru
          _
        // Predicated region
        $region53: #{tpu_custom_call.1} parent=11 // pred_check
          %p507 = pneg %p366
        $region54: #{tpu_custom_call.1} parent=11 // pred_check_branch
          %509 = sbr.rel (%p507) target = $region56
        $region55: #{tpu_custom_call.1} parent=11 // pred_region
          _
        $region56: #{tpu_custom_call.1} parent=11 // pred_fallthru
          _
        // Predicated region
        $region57: #{tpu_custom_call.1} parent=11 // pred_check
          %p510 = pneg %p387
        $region58: #{tpu_custom_call.1} parent=11 // pred_check_branch
          %512 = sbr.rel (%p510) target = $region60
        $region59: #{tpu_custom_call.1} parent=11 // pred_region
          _
        $region60: #{tpu_custom_call.1} parent=11 // pred_fallthru
          _
      $region12: #{tpu_custom_call.1} parent=5 // pred_fallthru
        _
      %p513 = scmp.lt.s32.totalorder %s31, 6
      // Predicated region
      $region61: #{tpu_custom_call.1} parent=5 // pred_check
        %p514 = pneg %p513
      $region62: #{tpu_custom_call.1} parent=5 // pred_check_branch
        %516 = sbr.rel (%p514) target = $region64
      $region63: #{tpu_custom_call.1} parent=5 // pred_region
        // Predicated region
        $region65: #{tpu_custom_call.1} parent=63 // pred_check
          %p517 = pneg %p51
        $region66: #{tpu_custom_call.1} parent=63 // pred_check_branch
          %519 = sbr.rel (%p517) target = $region68
        $region67: #{tpu_custom_call.1} parent=63 // pred_region
          %p520 = scmp.lt.s32.totalorder %s31, 5
          %s521 = scalar_select %p520, %s31, 5
          %s522 = smul.addr %s521, 4
          %s523 = scalar_lea.vmem %s0, %s522
        $region68: #{tpu_custom_call.1} parent=63 // pred_fallthru
          _
        // Predicated region
        $region69: #{tpu_custom_call.1} parent=63 // pred_check
          %p524 = pneg %p77
        $region70: #{tpu_custom_call.1} parent=63 // pred_check_branch
          %526 = sbr.rel (%p524) target = $region72
        $region71: #{tpu_custom_call.1} parent=63 // pred_region
          %s527 = sand.u32 %s67, 1
          %s528 = scalar_lea.sflag [#allocation4], %s527
          %s529 = sand.u32 %s67, 1
          %s530 = smul.addr %s529, 4
          %s531 = scalar_lea.vmem [#allocation3], %s530
          %s533 = ssub.s32 64, 64
          %534 = vsyncadd %s528, %s533
          %s535 = smul.addr %s31, 64
          %s536 = scalar_lea.hbm %s1, %s535
          %s538 = sshll.u32 %s531, 4
          %s539 = int_to_ptr.vmem [resolvable:$true] %s538
          %541 = dma.hbm_to_vmem [thread:$0]  %s536, 64, %s539, %s528
        $region72: #{tpu_custom_call.1} parent=63 // pred_fallthru
          _
        // Predicated region
        $region73: #{tpu_custom_call.1} parent=63 // pred_check
          %p542 = pneg %p103
        $region74: #{tpu_custom_call.1} parent=63 // pred_check_branch
          %544 = sbr.rel (%p542) target = $region76
        $region75: #{tpu_custom_call.1} parent=63 // pred_region
          %s545 = sand.u32 %s31, 1
          %s546 = scalar_lea.sflag [#allocation6], %s545
          %s547 = sand.u32 %s93, 1
          %s548 = smul.addr %s547, 4
          %s549 = scalar_lea.vmem [#allocation5], %s548
          %s551 = ssub.s32 64, 64
          %552 = vsyncadd %s546, %s551
          %s553 = smul.addr %s31, 64
          %s554 = scalar_lea.hbm %s2, %s553
          %s556 = sshll.u32 %s549, 4
          %s557 = int_to_ptr.vmem [resolvable:$true] %s556
          %559 = dma.hbm_to_vmem [thread:$0]  %s554, 64, %s557, %s546
        $region76: #{tpu_custom_call.1} parent=63 // pred_fallthru
          _
        // Predicated region
        $region77: #{tpu_custom_call.1} parent=63 // pred_check
          %p560 = pneg %p129
        $region78: #{tpu_custom_call.1} parent=63 // pred_check_branch
          %562 = sbr.rel (%p560) target = $region80
        $region79: #{tpu_custom_call.1} parent=63 // pred_region
          %s563 = sand.u32 %s31, 1
          %s564 = scalar_lea.sflag [#allocation6], %s563
          %s565 = sand.u32 %s119, 1
          %s566 = scalar_lea.vmem [#allocation7], %s565
          %s568 = ssub.s32 16, 16
          %569 = vsyncadd %s564, %s568
          %s570 = smul.addr %s31, 16
          %s571 = scalar_lea.hbm %s3, %s570
          %s573 = sshll.u32 %s566, 4
          %s574 = int_to_ptr.vmem [resolvable:$true] %s573
          %576 = dma.hbm_to_vmem [thread:$0]  %s571, 16, %s574, %s564
        $region80: #{tpu_custom_call.1} parent=63 // pred_fallthru
          _
      $region64: #{tpu_custom_call.1} parent=5 // pred_fallthru
        _
      %p577 = scmp.le.s32.totalorder 1, %s31
      %p578 = scmp.lt.s32.totalorder %s31, 7
      %p579 = pnand %p577, %p578
      %p580 = pneg %p579
      // Predicated region
      $region81: #{tpu_custom_call.1} parent=5 // pred_check
        _
      $region82: #{tpu_custom_call.1} parent=5 // pred_check_branch
        %582 = sbr.rel (%p579) target = $region84
      $region83: #{tpu_custom_call.1} parent=5 // pred_region
        %s583 = ssub.s32 %s31, 1
        %s584 = sand.u32 %s70, 1
        %s585 = scalar_lea.sflag [#allocation4], %s584
        %s586 = sand.u32 %s70, 1
        %s587 = smul.addr %s586, 4
        %s588 = scalar_lea.vmem [#allocation3], %s587
        // Predicated region
        $region85: #{tpu_custom_call.1} parent=83 // pred_check
          %p589 = pneg %p83
        $region86: #{tpu_custom_call.1} parent=83 // pred_check_branch
          %591 = sbr.rel (%p589) target = $region88
        $region87: #{tpu_custom_call.1} parent=83 // pred_region
          %592 = dma.done %s585, 64
        $region88: #{tpu_custom_call.1} parent=83 // pred_fallthru
          _
        %s593 = sand.u32 %s36, 1
        %s594 = scalar_lea.sflag [#allocation6], %s593
        %s595 = sand.u32 %s96, 1
        %s596 = smul.addr %s595, 4
        %s597 = scalar_lea.vmem [#allocation5], %s596
        // Predicated region
        $region89: #{tpu_custom_call.1} parent=83 // pred_check
          %p598 = pneg %p109
        $region90: #{tpu_custom_call.1} parent=83 // pred_check_branch
          %600 = sbr.rel (%p598) target = $region92
        $region91: #{tpu_custom_call.1} parent=83 // pred_region
          %601 = dma.done %s594, 64
        $region92: #{tpu_custom_call.1} parent=83 // pred_fallthru
          _
        %s602 = sand.u32 %s36, 1
        %s603 = scalar_lea.sflag [#allocation6], %s602
        %s604 = sand.u32 %s122, 1
        %s605 = scalar_lea.vmem [#allocation7], %s604
        // Predicated region
        $region93: #{tpu_custom_call.1} parent=83 // pred_check
          %p606 = pneg %p135
        $region94: #{tpu_custom_call.1} parent=83 // pred_check_branch
          %608 = sbr.rel (%p606) target = $region96
        $region95: #{tpu_custom_call.1} parent=83 // pred_region
          %609 = dma.done %s603, 16
        $region96: #{tpu_custom_call.1} parent=83 // pred_fallthru
          _
        // Predicated region
        $region97: #{tpu_custom_call.1} parent=83 // pred_check
          %p610 = pneg %p156
        $region98: #{tpu_custom_call.1} parent=83 // pred_check_branch
          %612 = sbr.rel (%p610) target = $region100
        $region99: #{tpu_custom_call.1} parent=83 // pred_region
          %613 = dma.done [#allocation9], 16
        $region100: #{tpu_custom_call.1} parent=83 // pred_fallthru
          _
        // Predicated region
        $region101: #{tpu_custom_call.1} parent=83 // pred_check
          %p614 = pneg %p177
        $region102: #{tpu_custom_call.1} parent=83 // pred_check_branch
          %616 = sbr.rel (%p614) target = $region104
        $region103: #{tpu_custom_call.1} parent=83 // pred_region
          %617 = dma.done [#allocation9], 16
        $region104: #{tpu_custom_call.1} parent=83 // pred_fallthru
          _
        // Predicated region
        $region105: #{tpu_custom_call.1} parent=83 // pred_check
          %p618 = pneg %p219
        $region106: #{tpu_custom_call.1} parent=83 // pred_check_branch
          %620 = sbr.rel (%p618) target = $region108
        $region107: #{tpu_custom_call.1} parent=83 // pred_region
          %621 = dma.done [#allocation12], 16
        $region108: #{tpu_custom_call.1} parent=83 // pred_fallthru
          _
        // Predicated region
        $region109: #{tpu_custom_call.1} parent=83 // pred_check
          %p622 = pneg %p240
        $region110: #{tpu_custom_call.1} parent=83 // pred_check_branch
          %624 = sbr.rel (%p622) target = $region112
        $region111: #{tpu_custom_call.1} parent=83 // pred_region
          %625 = dma.done [#allocation12], 384
        $region112: #{tpu_custom_call.1} parent=83 // pred_fallthru
          _
        // Predicated region
        $region113: #{tpu_custom_call.1} parent=83 // pred_check
          %p626 = pneg %p261
        $region114: #{tpu_custom_call.1} parent=83 // pred_check_branch
          %628 = sbr.rel (%p626) target = $region116
        $region115: #{tpu_custom_call.1} parent=83 // pred_region
          %629 = dma.done [#allocation15], 1536
        $region116: #{tpu_custom_call.1} parent=83 // pred_fallthru
          _
        // Predicated region
        $region117: #{tpu_custom_call.1} parent=83 // pred_check
          %p630 = pneg %p282
        $region118: #{tpu_custom_call.1} parent=83 // pred_check_branch
          %632 = sbr.rel (%p630) target = $region120
        $region119: #{tpu_custom_call.1} parent=83 // pred_region
          %633 = dma.done [#allocation15], 384
        $region120: #{tpu_custom_call.1} parent=83 // pred_fallthru
          _
        %p634 = scmp.lt.s32.totalorder %s36, 5
        %s635 = scalar_select %p634, %s36, 5
        %s636 = smul.addr %s635, 4
        %s637 = scalar_lea.vmem %s0, %s636
        %p638 = pneg %p57
        %p639 = pneg %p54
        %s640 = sand.u32 %s70, 1
        %s641 = scalar_lea.sflag [#allocation4], %s640
        %s642 = sand.u32 %s70, 1
        %s643 = smul.addr %s642, 4
        %s644 = scalar_lea.vmem [#allocation3], %s643
        %p645 = pneg %p83
        %p646 = pneg %p80
        %s647 = sand.u32 %s36, 1
        %s648 = scalar_lea.sflag [#allocation6], %s647
        %s649 = sand.u32 %s96, 1
        %s650 = smul.addr %s649, 4
        %s651 = scalar_lea.vmem [#allocation5], %s650
        %p652 = pneg %p109
        %p653 = pneg %p106
        %s654 = sand.u32 %s36, 1
        %s655 = scalar_lea.sflag [#allocation6], %s654
        %s656 = sand.u32 %s122, 1
        %s657 = scalar_lea.vmem [#allocation7], %s656
        %p658 = pneg %p135
        %p659 = pneg %p132
        %p660 = pneg %p156
        %p661 = pneg %p153
        %p662 = pneg %p177
        %p663 = pneg %p174
        %p664 = pneg %p198
        %p665 = pneg %p195
        %p666 = pneg %p219
        %p667 = pneg %p216
        %p668 = pneg %p240
        %p669 = pneg %p237
        %p670 = pneg %p261
        %p671 = pneg %p258
        %p672 = pneg %p282
        %p673 = pneg %p279
        %p674 = pneg %p303
        %p675 = pneg %p300
        %p676 = pneg %p324
        %p677 = pneg %p321
        %p678 = pneg %p345
        %p679 = pneg %p342
        %p680 = pneg %p366
        %p681 = pneg %p363
        %p682 = pneg %p387
        %p683 = pneg %p384
        %p684 = pneg %p408
        %p685 = pneg %p405
        %p686 = scmp.lt.s32.totalorder %s36, 5
        %s687 = scalar_select %p686, %s36, 5
        %s688 = smul.addr %s687, 4
        %s689 = scalar_lea.vmem %s0, %s688
        %p690 = scmp.eq.s32.totalorder %s36, 0
        // Predicated region
        $region121: #{tpu_custom_call.1} parent=83 // pred_check
          %p691 = pneg %p690
        $region122: #{tpu_custom_call.1} parent=83 // pred_check_branch
          %693 = sbr.rel (%p691) target = $region124
        $region123: #{tpu_custom_call.1} parent=83 // pred_region
          %vm694 = vcmask 257024
          %695 = vst.msk [vmem:[#allocation2] sm:$0xf] %vm694, 0.0
        $region124: #{tpu_custom_call.1} parent=83 // pred_fallthru
          _
        %v696 = vld [vmem:[%s689] sm:$0xf]
        %v697 = vld [vmem:[%s588] sm:$0xf]
        %v698 = vld [vmem:[%s597] sm:$0xf]
        %v699 = vld [vmem:[%s605] sm:$0x1]
        %v700 = vld [vmem:[#allocation2] sm:$0xf]
        %v701 = vld [vmem:[#allocation8] sm:$0x1]
        %v703 = vlaneseq
        %v704 = vshrl.u32 %v703, 7
        %v705 = vsub.s32 0, %v704
        %v706 = vrot.slane %v701, %v705
        %v708 = vmul.f32 %v698, %v706
        %v709 = vld [vmem:[#allocation10] sm:$0x1]
        %v711 = vlaneseq
        %v712 = vshrl.u32 %v711, 7
        %v713 = vsub.s32 0, %v712
        %v714 = vrot.slane %v709, %v713
        %v716 = vadd.f32 %v708, %v714
        %v717 = vmax.f32 %v716, 0.0
        %v718 = vsub.f32 0.0, %v717
        %v719 = vmul.f32 %v718, 1.442695
        %v720 = vpow.pop %v719
        %v721 = vmul.f32 %v697, %v696
        %v722 = vsub.f32 1.0, %v697
        %v723 = vmul.f32 %v720, %v696
        %v724 = vsub.f32 1.0, %v720
        %v726 = vlaneseq
        %v727 = vshrl.u32 %v726, 7
        %v728 = vsub.s32 0, %v727
        %v729 = vrot.slane %v699, %v728
        %v731 = vmul.f32 %v724, %v729
        %v732 = vadd.f32 %v723, %v731
        %v733 = vmul.f32 %v722, %v732
        %v734 = vadd.f32 %v721, %v733
        %v735 = vld [vmem:[%s6] sm:$0xff]
        %v736 = vld [vmem:[#allocation11] sm:$0x1]
        %v738 = vlaneseq
        %v739 = vshrl.u32 %v738, 7
        %v740 = vsub.s32 0, %v739
        %v741 = vrot.slane %v736, %v740
        %vm743 = vcmask 64512
        %v745 = vsel %vm743, %v698, 0
        %747 = vmatprep.subr.mxu0 0.0
        %748 = vmatpush1.msra.mxu0 %v735
        %749 = vmatprep.subr.mxu0 0.0
        %750 = vmatpush1.msra.mxu0 0.0
        %751 = vmatprep.subr.mxu0 0.0
        %752 = vmatpush1.msra.mxu0 0.0
        %753 = vmatprep.subr.mxu0 0.0
        %754 = vmatpush1.msra.mxu0 0.0
        %755 = vmatprep.subr.mxu0 0.0
        %756 = vmatpush1.msra.mxu0 0.0
        %757 = vmatprep.subr.mxu0 0.0
        %758 = vmatpush1.msra.mxu0 0.0
        %759 = vmatprep.subr.mxu0 0.0
        %760 = vmatpush1.msra.mxu0 0.0
        %761 = vmatprep.subr.mxu0 0.0
        %762 = vmatpush1.msra.mxu0 0.0
        %763 = vmatprep.subr.mxu0 0.0
        %764 = vmatpush1.msra.mxu0 0.0
        %765 = vmatprep.subr.mxu0 0.0
        %766 = vmatpush1.msra.mxu0 0.0
        %767 = vmatprep.subr.mxu0 0.0
        %768 = vmatpush1.msra.mxu0 0.0
        %769 = vmatprep.subr.mxu0 0.0
        %770 = vmatpush1.msra.mxu0 0.0
        %771 = vmatprep.subr.mxu0 0.0
        %772 = vmatpush1.msra.mxu0 0.0
        %773 = vmatprep.subr.mxu0 0.0
        %774 = vmatpush1.msra.mxu0 0.0
        %775 = vmatprep.subr.mxu0 0.0
        %776 = vmatpush1.msra.mxu0 0.0
        %777 = vmatprep.subr.mxu0 0.0
        %778 = vmatpush1.msra.mxu0 0.0
        %779 = vmatprep.subr.mxu0 0.0
        %780 = vmatpush1.msra.mxu0 0.0
        %781 = vmatprep.subr.mxu0 0.0
        %782 = vmatpush1.msra.mxu0 0.0
        %783 = vmatprep.subr.mxu0 0.0
        %784 = vmatpush1.msra.mxu0 0.0
        %785 = vmatprep.subr.mxu0 0.0
        %786 = vmatpush1.msra.mxu0 0.0
        %787 = vmatprep.subr.mxu0 0.0
        %788 = vmatpush1.msra.mxu0 0.0
        %789 = vmatprep.subr.mxu0 0.0
        %790 = vmatpush1.msra.mxu0 0.0
        %791 = vmatprep.subr.mxu0 0.0
        %792 = vmatpush1.msra.mxu0 0.0
        %793 = vmatprep.subr.mxu0 0.0
        %794 = vmatpush1.msra.mxu0 0.0
        %795 = vmatprep.subr.mxu0 0.0
        %796 = vmatpush1.msra.mxu0 0.0
        %797 = vmatprep.subr.mxu0 0.0
        %798 = vmatpush1.msra.mxu0 0.0
        %799 = vmatprep.subr.mxu0 0.0
        %800 = vmatpush1.msra.mxu0 0.0
        %801 = vmatprep.subr.mxu0 0.0
        %802 = vmatpush1.msra.mxu0 0.0
        %803 = vmatprep.subr.mxu0 0.0
        %804 = vmatpush1.msra.mxu0 0.0
        %805 = vmatprep.subr.mxu0 0.0
        %806 = vmatpush1.msra.mxu0 0.0
        %807 = vmatprep.subr.mxu0 0.0
        %808 = vmatpush1.msra.mxu0 0.0
        %809 = vmatprep.subr.mxu0 0.0
        %810 = vmatpush1.msra.mxu0 0.0
        %811 = vmatprep.mubr.f32.mxu0 0.0
        %812 = vmatmul.mubr.f32.gmra.mrb[0].mxu0 %v745
        %v813 = vpop.f32.mrb[0].mxu0
        %v814 = vadd.f32 %v741, %v813
        %v815 = vpop.f32.mrb[0].mxu0
        %816 = vdwg.mxu0
        %v817 = vmax.f32 %v814, 0.0
        %v818 = vsub.f32 0.0, %v817
        %v819 = vmul.f32 %v818, 1.442695
        %v820 = vpow.pop %v819
        %v821 = vmul.f32 %v820, %v700
        %v822 = vld [vmem:[#allocation13] sm:$0xff]
        %v823 = vld [vmem:[#allocation14] sm:$0xff]
        %v824 = vld [vmem:[#allocation14 + $0x8] sm:$0xff]
        %v825 = vld [vmem:[#allocation14 + $0x10] sm:$0xff]
        %v826 = vld [vmem:[#allocation14 + $0x18] sm:$0xff]
        %vm827 = vcmask 261120
        %v829 = vsel %vm827, %v821, 0
        %831 = vmatprep.subr.mxu0 0.0
        %832 = vmatpush1.msra.mxu0 %v823
        %833 = vmatprep.subr.mxu0 0.0
        %834 = vmatpush1.msra.mxu0 %v824
        %835 = vmatprep.subr.mxu0 0.0
        %836 = vmatpush1.msra.mxu0 %v825
        %837 = vmatprep.subr.mxu0 0.0
        %838 = vmatpush1.msra.mxu0 %v826
        %839 = vmatprep.subr.mxu0 0.0
        %840 = vmatpush1.msra.mxu0 0.0
        %841 = vmatprep.subr.mxu0 0.0
        %842 = vmatpush1.msra.mxu0 0.0
        %843 = vmatprep.subr.mxu0 0.0
        %844 = vmatpush1.msra.mxu0 0.0
        %845 = vmatprep.subr.mxu0 0.0
        %846 = vmatpush1.msra.mxu0 0.0
        %847 = vmatprep.subr.mxu0 0.0
        %848 = vmatpush1.msra.mxu0 0.0
        %849 = vmatprep.subr.mxu0 0.0
        %850 = vmatpush1.msra.mxu0 0.0
        %851 = vmatprep.subr.mxu0 0.0
        %852 = vmatpush1.msra.mxu0 0.0
        %853 = vmatprep.subr.mxu0 0.0
        %854 = vmatpush1.msra.mxu0 0.0
        %855 = vmatprep.subr.mxu0 0.0
        %856 = vmatpush1.msra.mxu0 0.0
        %857 = vmatprep.subr.mxu0 0.0
        %858 = vmatpush1.msra.mxu0 0.0
        %859 = vmatprep.subr.mxu0 0.0
        %860 = vmatpush1.msra.mxu0 0.0
        %861 = vmatprep.subr.mxu0 0.0
        %862 = vmatpush1.msra.mxu0 0.0
        %863 = vmatprep.subr.mxu0 0.0
        %864 = vmatpush1.msra.mxu0 0.0
        %865 = vmatprep.subr.mxu0 0.0
        %866 = vmatpush1.msra.mxu0 0.0
        %867 = vmatprep.subr.mxu0 0.0
        %868 = vmatpush1.msra.mxu0 0.0
        %869 = vmatprep.subr.mxu0 0.0
        %870 = vmatpush1.msra.mxu0 0.0
        %871 = vmatprep.subr.mxu0 0.0
        %872 = vmatpush1.msra.mxu0 0.0
        %873 = vmatprep.subr.mxu0 0.0
        %874 = vmatpush1.msra.mxu0 0.0
        %875 = vmatprep.subr.mxu0 0.0
        %876 = vmatpush1.msra.mxu0 0.0
        %877 = vmatprep.subr.mxu0 0.0
        %878 = vmatpush1.msra.mxu0 0.0
        %879 = vmatprep.subr.mxu0 0.0
        %880 = vmatpush1.msra.mxu0 0.0
        %881 = vmatprep.subr.mxu0 0.0
        %882 = vmatpush1.msra.mxu0 0.0
        %883 = vmatprep.subr.mxu0 0.0
        %884 = vmatpush1.msra.mxu0 0.0
        %885 = vmatprep.subr.mxu0 0.0
        %886 = vmatpush1.msra.mxu0 0.0
        %887 = vmatprep.subr.mxu0 0.0
        %888 = vmatpush1.msra.mxu0 0.0
        %889 = vmatprep.subr.mxu0 0.0
        %890 = vmatpush1.msra.mxu0 0.0
        %891 = vmatprep.subr.mxu0 0.0
        %892 = vmatpush1.msra.mxu0 0.0
        %893 = vmatprep.subr.mxu0 0.0
        %894 = vmatpush1.msra.mxu0 0.0
        %895 = vmatprep.mubr.f32.mxu0 0.0
        %896 = vmatmul.mubr.f32.gmra.mrb[0].mxu0 %v829
        %v897 = vpop.f32.mrb[0].mxu0
        %v898 = vadd.f32 0.0, %v897
        %v899 = vpop.f32.mrb[0].mxu0
        %900 = vdwg.mxu0
        %v902 = vsel %vm743, %v734, 0
        %904 = vmatprep.subr.mxu0 0.0
        %905 = vmatpush1.msra.mxu0 %v822
        %906 = vmatprep.subr.mxu0 0.0
        %907 = vmatpush1.msra.mxu0 0.0
        %908 = vmatprep.subr.mxu0 0.0
        %909 = vmatpush1.msra.mxu0 0.0
        %910 = vmatprep.subr.mxu0 0.0
        %911 = vmatpush1.msra.mxu0 0.0
        %912 = vmatprep.subr.mxu0 0.0
        %913 = vmatpush1.msra.mxu0 0.0
        %914 = vmatprep.subr.mxu0 0.0
        %915 = vmatpush1.msra.mxu0 0.0
        %916 = vmatprep.subr.mxu0 0.0
        %917 = vmatpush1.msra.mxu0 0.0
        %918 = vmatprep.subr.mxu0 0.0
        %919 = vmatpush1.msra.mxu0 0.0
        %920 = vmatprep.subr.mxu0 0.0
        %921 = vmatpush1.msra.mxu0 0.0
        %922 = vmatprep.subr.mxu0 0.0
        %923 = vmatpush1.msra.mxu0 0.0
        %924 = vmatprep.subr.mxu0 0.0
        %925 = vmatpush1.msra.mxu0 0.0
        %926 = vmatprep.subr.mxu0 0.0
        %927 = vmatpush1.msra.mxu0 0.0
        %928 = vmatprep.subr.mxu0 0.0
        %929 = vmatpush1.msra.mxu0 0.0
        %930 = vmatprep.subr.mxu0 0.0
        %931 = vmatpush1.msra.mxu0 0.0
        %932 = vmatprep.subr.mxu0 0.0
        %933 = vmatpush1.msra.mxu0 0.0
        %934 = vmatprep.subr.mxu0 0.0
        %935 = vmatpush1.msra.mxu0 0.0
        %936 = vmatprep.subr.mxu0 0.0
        %937 = vmatpush1.msra.mxu0 0.0
        %938 = vmatprep.subr.mxu0 0.0
        %939 = vmatpush1.msra.mxu0 0.0
        %940 = vmatprep.subr.mxu0 0.0
        %941 = vmatpush1.msra.mxu0 0.0
        %942 = vmatprep.subr.mxu0 0.0
        %943 = vmatpush1.msra.mxu0 0.0
        %944 = vmatprep.subr.mxu0 0.0
        %945 = vmatpush1.msra.mxu0 0.0
        %946 = vmatprep.subr.mxu0 0.0
        %947 = vmatpush1.msra.mxu0 0.0
        %948 = vmatprep.subr.mxu0 0.0
        %949 = vmatpush1.msra.mxu0 0.0
        %950 = vmatprep.subr.mxu0 0.0
        %951 = vmatpush1.msra.mxu0 0.0
        %952 = vmatprep.subr.mxu0 0.0
        %953 = vmatpush1.msra.mxu0 0.0
        %954 = vmatprep.subr.mxu0 0.0
        %955 = vmatpush1.msra.mxu0 0.0
        %956 = vmatprep.subr.mxu0 0.0
        %957 = vmatpush1.msra.mxu0 0.0
        %958 = vmatprep.subr.mxu0 0.0
        %959 = vmatpush1.msra.mxu0 0.0
        %960 = vmatprep.subr.mxu0 0.0
        %961 = vmatpush1.msra.mxu0 0.0
        %962 = vmatprep.subr.mxu0 0.0
        %963 = vmatpush1.msra.mxu0 0.0
        %964 = vmatprep.subr.mxu0 0.0
        %965 = vmatpush1.msra.mxu0 0.0
        %966 = vmatprep.subr.mxu0 0.0
        %967 = vmatpush1.msra.mxu0 0.0
        %968 = vmatprep.mubr.f32.mxu0 0.0
        %969 = vmatmul.mubr.f32.gmra.mrb[0].mxu0 %v902
        %v970 = vpop.f32.mrb[0].mxu0
        %v971 = vadd.f32 %v898, %v970
        %v972 = vpop.f32.mrb[0].mxu0
        %973 = vdwg.mxu0
        %v974 = vld [vmem:[#allocation16] sm:$0xff]
        %v976 = vsel %vm743, %v697, 0
        %978 = vmatprep.subr.mxu0 0.0
        %979 = vmatpush1.msra.mxu0 %v974
        %980 = vmatprep.subr.mxu0 0.0
        %981 = vmatpush1.msra.mxu0 0.0
        %982 = vmatprep.subr.mxu0 0.0
        %983 = vmatpush1.msra.mxu0 0.0
        %984 = vmatprep.subr.mxu0 0.0
        %985 = vmatpush1.msra.mxu0 0.0
        %986 = vmatprep.subr.mxu0 0.0
        %987 = vmatpush1.msra.mxu0 0.0
        %988 = vmatprep.subr.mxu0 0.0
        %989 = vmatpush1.msra.mxu0 0.0
        %990 = vmatprep.subr.mxu0 0.0
        %991 = vmatpush1.msra.mxu0 0.0
        %992 = vmatprep.subr.mxu0 0.0
        %993 = vmatpush1.msra.mxu0 0.0
        %994 = vmatprep.subr.mxu0 0.0
        %995 = vmatpush1.msra.mxu0 0.0
        %996 = vmatprep.subr.mxu0 0.0
        %997 = vmatpush1.msra.mxu0 0.0
        %998 = vmatprep.subr.mxu0 0.0
        %999 = vmatpush1.msra.mxu0 0.0
        %1000 = vmatprep.subr.mxu0 0.0
        %1001 = vmatpush1.msra.mxu0 0.0
        %1002 = vmatprep.subr.mxu0 0.0
        %1003 = vmatpush1.msra.mxu0 0.0
        %1004 = vmatprep.subr.mxu0 0.0
        %1005 = vmatpush1.msra.mxu0 0.0
        %1006 = vmatprep.subr.mxu0 0.0
        %1007 = vmatpush1.msra.mxu0 0.0
        %1008 = vmatprep.subr.mxu0 0.0
        %1009 = vmatpush1.msra.mxu0 0.0
        %1010 = vmatprep.subr.mxu0 0.0
        %1011 = vmatpush1.msra.mxu0 0.0
        %1012 = vmatprep.subr.mxu0 0.0
        %1013 = vmatpush1.msra.mxu0 0.0
        %1014 = vmatprep.subr.mxu0 0.0
        %1015 = vmatpush1.msra.mxu0 0.0
        %1016 = vmatprep.subr.mxu0 0.0
        %1017 = vmatpush1.msra.mxu0 0.0
        %1018 = vmatprep.subr.mxu0 0.0
        %1019 = vmatpush1.msra.mxu0 0.0
        %1020 = vmatprep.subr.mxu0 0.0
        %1021 = vmatpush1.msra.mxu0 0.0
        %1022 = vmatprep.subr.mxu0 0.0
        %1023 = vmatpush1.msra.mxu0 0.0
        %1024 = vmatprep.subr.mxu0 0.0
        %1025 = vmatpush1.msra.mxu0 0.0
        %1026 = vmatprep.subr.mxu0 0.0
        %1027 = vmatpush1.msra.mxu0 0.0
        %1028 = vmatprep.subr.mxu0 0.0
        %1029 = vmatpush1.msra.mxu0 0.0
        %1030 = vmatprep.subr.mxu0 0.0
        %1031 = vmatpush1.msra.mxu0 0.0
        %1032 = vmatprep.subr.mxu0 0.0
        %1033 = vmatpush1.msra.mxu0 0.0
        %1034 = vmatprep.subr.mxu0 0.0
        %1035 = vmatpush1.msra.mxu0 0.0
        %1036 = vmatprep.subr.mxu0 0.0
        %1037 = vmatpush1.msra.mxu0 0.0
        %1038 = vmatprep.subr.mxu0 0.0
        %1039 = vmatpush1.msra.mxu0 0.0
        %1040 = vmatprep.subr.mxu0 0.0
        %1041 = vmatpush1.msra.mxu0 0.0
        %1042 = vmatprep.mubr.f32.mxu0 0.0
        %1043 = vmatmul.mubr.f32.gmra.mrb[0].mxu0 %v976
        %v1044 = vpop.f32.mrb[0].mxu0
        %v1045 = vadd.f32 0.0, %v1044
        %v1046 = vpop.f32.mrb[0].mxu0
        %1047 = vdwg.mxu0
        %v1048 = vadd.f32 %v971, %v1045
        %v1049 = vld [vmem:[%s11] sm:$0x1]
        %v1051 = vlaneseq
        %v1052 = vshrl.u32 %v1051, 7
        %v1053 = vsub.s32 0, %v1052
        %v1054 = vrot.slane %v1049, %v1053
        %v1056 = vadd.f32 %v1048, %v1054
        %v1057 = vsub.f32 0.0, %v1056
        %v1058 = vmul.f32 %v1057, 1.442695
        %v1059 = vpow.pop %v1058
        %v1060 = vadd.f32 %v1059, 1.0
        %v1061 = vrcp.pop %v1060
        %v1062 = vmul.f32 1.0, %v1061
        %s1063 = scalar_lea.vmem [#allocation13], 8
        %v1064 = vld [vmem:[%s1063] sm:$0xff]
        %s1065 = scalar_lea.vmem [#allocation14], 32
        %v1066 = vld [vmem:[%s1065] sm:$0xff]
        %v1067 = vld [vmem:[%s1065 + $0x8] sm:$0xff]
        %v1068 = vld [vmem:[%s1065 + $0x10] sm:$0xff]
        %v1069 = vld [vmem:[%s1065 + $0x18] sm:$0xff]
        %1070 = vmatprep.subr.mxu0 0.0
        %1071 = vmatpush1.msra.mxu0 %v1066
        %1072 = vmatprep.subr.mxu0 0.0
        %1073 = vmatpush1.msra.mxu0 %v1067
        %1074 = vmatprep.subr.mxu0 0.0
        %1075 = vmatpush1.msra.mxu0 %v1068
        %1076 = vmatprep.subr.mxu0 0.0
        %1077 = vmatpush1.msra.mxu0 %v1069
        %1078 = vmatprep.subr.mxu0 0.0
        %1079 = vmatpush1.msra.mxu0 0.0
        %1080 = vmatprep.subr.mxu0 0.0
        %1081 = vmatpush1.msra.mxu0 0.0
        %1082 = vmatprep.subr.mxu0 0.0
        %1083 = vmatpush1.msra.mxu0 0.0
        %1084 = vmatprep.subr.mxu0 0.0
        %1085 = vmatpush1.msra.mxu0 0.0
        %1086 = vmatprep.subr.mxu0 0.0
        %1087 = vmatpush1.msra.mxu0 0.0
        %1088 = vmatprep.subr.mxu0 0.0
        %1089 = vmatpush1.msra.mxu0 0.0
        %1090 = vmatprep.subr.mxu0 0.0
        %1091 = vmatpush1.msra.mxu0 0.0
        %1092 = vmatprep.subr.mxu0 0.0
        %1093 = vmatpush1.msra.mxu0 0.0
        %1094 = vmatprep.subr.mxu0 0.0
        %1095 = vmatpush1.msra.mxu0 0.0
        %1096 = vmatprep.subr.mxu0 0.0
        %1097 = vmatpush1.msra.mxu0 0.0
        %1098 = vmatprep.subr.mxu0 0.0
        %1099 = vmatpush1.msra.mxu0 0.0
        %1100 = vmatprep.subr.mxu0 0.0
        %1101 = vmatpush1.msra.mxu0 0.0
        %1102 = vmatprep.subr.mxu0 0.0
        %1103 = vmatpush1.msra.mxu0 0.0
        %1104 = vmatprep.subr.mxu0 0.0
        %1105 = vmatpush1.msra.mxu0 0.0
        %1106 = vmatprep.subr.mxu0 0.0
        %1107 = vmatpush1.msra.mxu0 0.0
        %1108 = vmatprep.subr.mxu0 0.0
        %1109 = vmatpush1.msra.mxu0 0.0
        %1110 = vmatprep.subr.mxu0 0.0
        %1111 = vmatpush1.msra.mxu0 0.0
        %1112 = vmatprep.subr.mxu0 0.0
        %1113 = vmatpush1.msra.mxu0 0.0
        %1114 = vmatprep.subr.mxu0 0.0
        %1115 = vmatpush1.msra.mxu0 0.0
        %1116 = vmatprep.subr.mxu0 0.0
        %1117 = vmatpush1.msra.mxu0 0.0
        %1118 = vmatprep.subr.mxu0 0.0
        %1119 = vmatpush1.msra.mxu0 0.0
        %1120 = vmatprep.subr.mxu0 0.0
        %1121 = vmatpush1.msra.mxu0 0.0
        %1122 = vmatprep.subr.mxu0 0.0
        %1123 = vmatpush1.msra.mxu0 0.0
        %1124 = vmatprep.subr.mxu0 0.0
        %1125 = vmatpush1.msra.mxu0 0.0
        %1126 = vmatprep.subr.mxu0 0.0
        %1127 = vmatpush1.msra.mxu0 0.0
        %1128 = vmatprep.subr.mxu0 0.0
        %1129 = vmatpush1.msra.mxu0 0.0
        %1130 = vmatprep.subr.mxu0 0.0
        %1131 = vmatpush1.msra.mxu0 0.0
        %1132 = vmatprep.subr.mxu0 0.0
        %1133 = vmatpush1.msra.mxu0 0.0
        %1134 = vmatprep.mubr.f32.mxu0 0.0
        %1135 = vmatmul.mubr.f32.gmra.mrb[0].mxu0 %v829
        %v1136 = vpop.f32.mrb[0].mxu0
        %v1137 = vadd.f32 0.0, %v1136
        %v1138 = vpop.f32.mrb[0].mxu0
        %1139 = vdwg.mxu0
        %1140 = vmatprep.subr.mxu0 0.0
        %1141 = vmatpush1.msra.mxu0 %v1064
        %1142 = vmatprep.subr.mxu0 0.0
        %1143 = vmatpush1.msra.mxu0 0.0
        %1144 = vmatprep.subr.mxu0 0.0
        %1145 = vmatpush1.msra.mxu0 0.0
        %1146 = vmatprep.subr.mxu0 0.0
        %1147 = vmatpush1.msra.mxu0 0.0
        %1148 = vmatprep.subr.mxu0 0.0
        %1149 = vmatpush1.msra.mxu0 0.0
        %1150 = vmatprep.subr.mxu0 0.0
        %1151 = vmatpush1.msra.mxu0 0.0
        %1152 = vmatprep.subr.mxu0 0.0
        %1153 = vmatpush1.msra.mxu0 0.0
        %1154 = vmatprep.subr.mxu0 0.0
        %1155 = vmatpush1.msra.mxu0 0.0
        %1156 = vmatprep.subr.mxu0 0.0
        %1157 = vmatpush1.msra.mxu0 0.0
        %1158 = vmatprep.subr.mxu0 0.0
        %1159 = vmatpush1.msra.mxu0 0.0
        %1160 = vmatprep.subr.mxu0 0.0
        %1161 = vmatpush1.msra.mxu0 0.0
        %1162 = vmatprep.subr.mxu0 0.0
        %1163 = vmatpush1.msra.mxu0 0.0
        %1164 = vmatprep.subr.mxu0 0.0
        %1165 = vmatpush1.msra.mxu0 0.0
        %1166 = vmatprep.subr.mxu0 0.0
        %1167 = vmatpush1.msra.mxu0 0.0
        %1168 = vmatprep.subr.mxu0 0.0
        %1169 = vmatpush1.msra.mxu0 0.0
        %1170 = vmatprep.subr.mxu0 0.0
        %1171 = vmatpush1.msra.mxu0 0.0
        %1172 = vmatprep.subr.mxu0 0.0
        %1173 = vmatpush1.msra.mxu0 0.0
        %1174 = vmatprep.subr.mxu0 0.0
        %1175 = vmatpush1.msra.mxu0 0.0
        %1176 = vmatprep.subr.mxu0 0.0
        %1177 = vmatpush1.msra.mxu0 0.0
        %1178 = vmatprep.subr.mxu0 0.0
        %1179 = vmatpush1.msra.mxu0 0.0
        %1180 = vmatprep.subr.mxu0 0.0
        %1181 = vmatpush1.msra.mxu0 0.0
        %1182 = vmatprep.subr.mxu0 0.0
        %1183 = vmatpush1.msra.mxu0 0.0
        %1184 = vmatprep.subr.mxu0 0.0
        %1185 = vmatpush1.msra.mxu0 0.0
        %1186 = vmatprep.subr.mxu0 0.0
        %1187 = vmatpush1.msra.mxu0 0.0
        %1188 = vmatprep.subr.mxu0 0.0
        %1189 = vmatpush1.msra.mxu0 0.0
        %1190 = vmatprep.subr.mxu0 0.0
        %1191 = vmatpush1.msra.mxu0 0.0
        %1192 = vmatprep.subr.mxu0 0.0
        %1193 = vmatpush1.msra.mxu0 0.0
        %1194 = vmatprep.subr.mxu0 0.0
        %1195 = vmatpush1.msra.mxu0 0.0
        %1196 = vmatprep.subr.mxu0 0.0
        %1197 = vmatpush1.msra.mxu0 0.0
        %1198 = vmatprep.subr.mxu0 0.0
        %1199 = vmatpush1.msra.mxu0 0.0
        %1200 = vmatprep.subr.mxu0 0.0
        %1201 = vmatpush1.msra.mxu0 0.0
        %1202 = vmatprep.subr.mxu0 0.0
        %1203 = vmatpush1.msra.mxu0 0.0
        %1204 = vmatprep.mubr.f32.mxu0 0.0
        %1205 = vmatmul.mubr.f32.gmra.mrb[0].mxu0 %v902
        %v1206 = vpop.f32.mrb[0].mxu0
        %v1207 = vadd.f32 %v1137, %v1206
        %v1208 = vpop.f32.mrb[0].mxu0
        %1209 = vdwg.mxu0
        %s1210 = scalar_lea.vmem [#allocation16], 8
        %v1211 = vld [vmem:[%s1210] sm:$0xff]
        %1212 = vmatprep.subr.mxu0 0.0
        %1213 = vmatpush1.msra.mxu0 %v1211
        %1214 = vmatprep.subr.mxu0 0.0
        %1215 = vmatpush1.msra.mxu0 0.0
        %1216 = vmatprep.subr.mxu0 0.0
        %1217 = vmatpush1.msra.mxu0 0.0
        %1218 = vmatprep.subr.mxu0 0.0
        %1219 = vmatpush1.msra.mxu0 0.0
        %1220 = vmatprep.subr.mxu0 0.0
        %1221 = vmatpush1.msra.mxu0 0.0
        %1222 = vmatprep.subr.mxu0 0.0
        %1223 = vmatpush1.msra.mxu0 0.0
        %1224 = vmatprep.subr.mxu0 0.0
        %1225 = vmatpush1.msra.mxu0 0.0
        %1226 = vmatprep.subr.mxu0 0.0
        %1227 = vmatpush1.msra.mxu0 0.0
        %1228 = vmatprep.subr.mxu0 0.0
        %1229 = vmatpush1.msra.mxu0 0.0
        %1230 = vmatprep.subr.mxu0 0.0
        %1231 = vmatpush1.msra.mxu0 0.0
        %1232 = vmatprep.subr.mxu0 0.0
        %1233 = vmatpush1.msra.mxu0 0.0
        %1234 = vmatprep.subr.mxu0 0.0
        %1235 = vmatpush1.msra.mxu0 0.0
        %1236 = vmatprep.subr.mxu0 0.0
        %1237 = vmatpush1.msra.mxu0 0.0
        %1238 = vmatprep.subr.mxu0 0.0
        %1239 = vmatpush1.msra.mxu0 0.0
        %1240 = vmatprep.subr.mxu0 0.0
        %1241 = vmatpush1.msra.mxu0 0.0
        %1242 = vmatprep.subr.mxu0 0.0
        %1243 = vmatpush1.msra.mxu0 0.0
        %1244 = vmatprep.subr.mxu0 0.0
        %1245 = vmatpush1.msra.mxu0 0.0
        %1246 = vmatprep.subr.mxu0 0.0
        %1247 = vmatpush1.msra.mxu0 0.0
        %1248 = vmatprep.subr.mxu0 0.0
        %1249 = vmatpush1.msra.mxu0 0.0
        %1250 = vmatprep.subr.mxu0 0.0
        %1251 = vmatpush1.msra.mxu0 0.0
        %1252 = vmatprep.subr.mxu0 0.0
        %1253 = vmatpush1.msra.mxu0 0.0
        %1254 = vmatprep.subr.mxu0 0.0
        %1255 = vmatpush1.msra.mxu0 0.0
        %1256 = vmatprep.subr.mxu0 0.0
        %1257 = vmatpush1.msra.mxu0 0.0
        %1258 = vmatprep.subr.mxu0 0.0
        %1259 = vmatpush1.msra.mxu0 0.0
        %1260 = vmatprep.subr.mxu0 0.0
        %1261 = vmatpush1.msra.mxu0 0.0
        %1262 = vmatprep.subr.mxu0 0.0
        %1263 = vmatpush1.msra.mxu0 0.0
        %1264 = vmatprep.subr.mxu0 0.0
        %1265 = vmatpush1.msra.mxu0 0.0
        %1266 = vmatprep.subr.mxu0 0.0
        %1267 = vmatpush1.msra.mxu0 0.0
        %1268 = vmatprep.subr.mxu0 0.0
        %1269 = vmatpush1.msra.mxu0 0.0
        %1270 = vmatprep.subr.mxu0 0.0
        %1271 = vmatpush1.msra.mxu0 0.0
        %1272 = vmatprep.subr.mxu0 0.0
        %1273 = vmatpush1.msra.mxu0 0.0
        %1274 = vmatprep.subr.mxu0 0.0
        %1275 = vmatpush1.msra.mxu0 0.0
        %1276 = vmatprep.mubr.f32.mxu0 0.0
        %1277 = vmatmul.mubr.f32.gmra.mrb[0].mxu0 %v976
        %v1278 = vpop.f32.mrb[0].mxu0
        %v1279 = vadd.f32 0.0, %v1278
        %v1280 = vpop.f32.mrb[0].mxu0
        %1281 = vdwg.mxu0
        %v1282 = vadd.f32 %v1207, %v1279
        %s1283 = scalar_lea.vmem %s11, 1
        %v1284 = vld [vmem:[%s1283] sm:$0x1]
        %v1286 = vlaneseq
        %v1287 = vshrl.u32 %v1286, 7
        %v1288 = vsub.s32 0, %v1287
        %v1289 = vrot.slane %v1284, %v1288
        %v1291 = vadd.f32 %v1282, %v1289
        %v1292 = vsub.f32 0.0, %v1291
        %v1293 = vmul.f32 %v1292, 1.442695
        %v1294 = vpow.pop %v1293
        %v1295 = vadd.f32 %v1294, 1.0
        %v1296 = vrcp.pop %v1295
        %v1297 = vmul.f32 1.0, %v1296
        %v1298 = vmul.f32 %v1297, %v821
        %s1299 = scalar_lea.vmem [#allocation13], 16
        %v1300 = vld [vmem:[%s1299] sm:$0xff]
        %s1301 = scalar_lea.vmem [#allocation14], 64
        %v1302 = vld [vmem:[%s1301] sm:$0xff]
        %v1303 = vld [vmem:[%s1301 + $0x8] sm:$0xff]
        %v1304 = vld [vmem:[%s1301 + $0x10] sm:$0xff]
        %v1305 = vld [vmem:[%s1301 + $0x18] sm:$0xff]
        %v1307 = vsel %vm827, %v1298, 0
        %1309 = vmatprep.subr.mxu0 0.0
        %1310 = vmatpush1.msra.mxu0 %v1302
        %1311 = vmatprep.subr.mxu0 0.0
        %1312 = vmatpush1.msra.mxu0 %v1303
        %1313 = vmatprep.subr.mxu0 0.0
        %1314 = vmatpush1.msra.mxu0 %v1304
        %1315 = vmatprep.subr.mxu0 0.0
        %1316 = vmatpush1.msra.mxu0 %v1305
        %1317 = vmatprep.subr.mxu0 0.0
        %1318 = vmatpush1.msra.mxu0 0.0
        %1319 = vmatprep.subr.mxu0 0.0
        %1320 = vmatpush1.msra.mxu0 0.0
        %1321 = vmatprep.subr.mxu0 0.0
        %1322 = vmatpush1.msra.mxu0 0.0
        %1323 = vmatprep.subr.mxu0 0.0
        %1324 = vmatpush1.msra.mxu0 0.0
        %1325 = vmatprep.subr.mxu0 0.0
        %1326 = vmatpush1.msra.mxu0 0.0
        %1327 = vmatprep.subr.mxu0 0.0
        %1328 = vmatpush1.msra.mxu0 0.0
        %1329 = vmatprep.subr.mxu0 0.0
        %1330 = vmatpush1.msra.mxu0 0.0
        %1331 = vmatprep.subr.mxu0 0.0
        %1332 = vmatpush1.msra.mxu0 0.0
        %1333 = vmatprep.subr.mxu0 0.0
        %1334 = vmatpush1.msra.mxu0 0.0
        %1335 = vmatprep.subr.mxu0 0.0
        %1336 = vmatpush1.msra.mxu0 0.0
        %1337 = vmatprep.subr.mxu0 0.0
        %1338 = vmatpush1.msra.mxu0 0.0
        %1339 = vmatprep.subr.mxu0 0.0
        %1340 = vmatpush1.msra.mxu0 0.0
        %1341 = vmatprep.subr.mxu0 0.0
        %1342 = vmatpush1.msra.mxu0 0.0
        %1343 = vmatprep.subr.mxu0 0.0
        %1344 = vmatpush1.msra.mxu0 0.0
        %1345 = vmatprep.subr.mxu0 0.0
        %1346 = vmatpush1.msra.mxu0 0.0
        %1347 = vmatprep.subr.mxu0 0.0
        %1348 = vmatpush1.msra.mxu0 0.0
        %1349 = vmatprep.subr.mxu0 0.0
        %1350 = vmatpush1.msra.mxu0 0.0
        %1351 = vmatprep.subr.mxu0 0.0
        %1352 = vmatpush1.msra.mxu0 0.0
        %1353 = vmatprep.subr.mxu0 0.0
        %1354 = vmatpush1.msra.mxu0 0.0
        %1355 = vmatprep.subr.mxu0 0.0
        %1356 = vmatpush1.msra.mxu0 0.0
        %1357 = vmatprep.subr.mxu0 0.0
        %1358 = vmatpush1.msra.mxu0 0.0
        %1359 = vmatprep.subr.mxu0 0.0
        %1360 = vmatpush1.msra.mxu0 0.0
        %1361 = vmatprep.subr.mxu0 0.0
        %1362 = vmatpush1.msra.mxu0 0.0
        %1363 = vmatprep.subr.mxu0 0.0
        %1364 = vmatpush1.msra.mxu0 0.0
        %1365 = vmatprep.subr.mxu0 0.0
        %1366 = vmatpush1.msra.mxu0 0.0
        %1367 = vmatprep.subr.mxu0 0.0
        %1368 = vmatpush1.msra.mxu0 0.0
        %1369 = vmatprep.subr.mxu0 0.0
        %1370 = vmatpush1.msra.mxu0 0.0
        %1371 = vmatprep.subr.mxu0 0.0
        %1372 = vmatpush1.msra.mxu0 0.0
        %1373 = vmatprep.mubr.f32.mxu0 0.0
        %1374 = vmatmul.mubr.f32.gmra.mrb[0].mxu0 %v1307
        %v1375 = vpop.f32.mrb[0].mxu0
        %v1376 = vadd.f32 0.0, %v1375
        %v1377 = vpop.f32.mrb[0].mxu0
        %1378 = vdwg.mxu0
        %1379 = vmatprep.subr.mxu0 0.0
        %1380 = vmatpush1.msra.mxu0 %v1300
        %1381 = vmatprep.subr.mxu0 0.0
        %1382 = vmatpush1.msra.mxu0 0.0
        %1383 = vmatprep.subr.mxu0 0.0
        %1384 = vmatpush1.msra.mxu0 0.0
        %1385 = vmatprep.subr.mxu0 0.0
        %1386 = vmatpush1.msra.mxu0 0.0
        %1387 = vmatprep.subr.mxu0 0.0
        %1388 = vmatpush1.msra.mxu0 0.0
        %1389 = vmatprep.subr.mxu0 0.0
        %1390 = vmatpush1.msra.mxu0 0.0
        %1391 = vmatprep.subr.mxu0 0.0
        %1392 = vmatpush1.msra.mxu0 0.0
        %1393 = vmatprep.subr.mxu0 0.0
        %1394 = vmatpush1.msra.mxu0 0.0
        %1395 = vmatprep.subr.mxu0 0.0
        %1396 = vmatpush1.msra.mxu0 0.0
        %1397 = vmatprep.subr.mxu0 0.0
        %1398 = vmatpush1.msra.mxu0 0.0
        %1399 = vmatprep.subr.mxu0 0.0
        %1400 = vmatpush1.msra.mxu0 0.0
        %1401 = vmatprep.subr.mxu0 0.0
        %1402 = vmatpush1.msra.mxu0 0.0
        %1403 = vmatprep.subr.mxu0 0.0
        %1404 = vmatpush1.msra.mxu0 0.0
        %1405 = vmatprep.subr.mxu0 0.0
        %1406 = vmatpush1.msra.mxu0 0.0
        %1407 = vmatprep.subr.mxu0 0.0
        %1408 = vmatpush1.msra.mxu0 0.0
        %1409 = vmatprep.subr.mxu0 0.0
        %1410 = vmatpush1.msra.mxu0 0.0
        %1411 = vmatprep.subr.mxu0 0.0
        %1412 = vmatpush1.msra.mxu0 0.0
        %1413 = vmatprep.subr.mxu0 0.0
        %1414 = vmatpush1.msra.mxu0 0.0
        %1415 = vmatprep.subr.mxu0 0.0
        %1416 = vmatpush1.msra.mxu0 0.0
        %1417 = vmatprep.subr.mxu0 0.0
        %1418 = vmatpush1.msra.mxu0 0.0
        %1419 = vmatprep.subr.mxu0 0.0
        %1420 = vmatpush1.msra.mxu0 0.0
        %1421 = vmatprep.subr.mxu0 0.0
        %1422 = vmatpush1.msra.mxu0 0.0
        %1423 = vmatprep.subr.mxu0 0.0
        %1424 = vmatpush1.msra.mxu0 0.0
        %1425 = vmatprep.subr.mxu0 0.0
        %1426 = vmatpush1.msra.mxu0 0.0
        %1427 = vmatprep.subr.mxu0 0.0
        %1428 = vmatpush1.msra.mxu0 0.0
        %1429 = vmatprep.subr.mxu0 0.0
        %1430 = vmatpush1.msra.mxu0 0.0
        %1431 = vmatprep.subr.mxu0 0.0
        %1432 = vmatpush1.msra.mxu0 0.0
        %1433 = vmatprep.subr.mxu0 0.0
        %1434 = vmatpush1.msra.mxu0 0.0
        %1435 = vmatprep.subr.mxu0 0.0
        %1436 = vmatpush1.msra.mxu0 0.0
        %1437 = vmatprep.subr.mxu0 0.0
        %1438 = vmatpush1.msra.mxu0 0.0
        %1439 = vmatprep.subr.mxu0 0.0
        %1440 = vmatpush1.msra.mxu0 0.0
        %1441 = vmatprep.subr.mxu0 0.0
        %1442 = vmatpush1.msra.mxu0 0.0
        %1443 = vmatprep.mubr.f32.mxu0 0.0
        %1444 = vmatmul.mubr.f32.gmra.mrb[0].mxu0 %v902
        %v1445 = vpop.f32.mrb[0].mxu0
        %v1446 = vadd.f32 %v1376, %v1445
        %v1447 = vpop.f32.mrb[0].mxu0
        %1448 = vdwg.mxu0
        %s1449 = scalar_lea.vmem [#allocation16], 16
        %v1450 = vld [vmem:[%s1449] sm:$0xff]
        %1451 = vmatprep.subr.mxu0 0.0
        %1452 = vmatpush1.msra.mxu0 %v1450
        %1453 = vmatprep.subr.mxu0 0.0
        %1454 = vmatpush1.msra.mxu0 0.0
        %1455 = vmatprep.subr.mxu0 0.0
        %1456 = vmatpush1.msra.mxu0 0.0
        %1457 = vmatprep.subr.mxu0 0.0
        %1458 = vmatpush1.msra.mxu0 0.0
        %1459 = vmatprep.subr.mxu0 0.0
        %1460 = vmatpush1.msra.mxu0 0.0
        %1461 = vmatprep.subr.mxu0 0.0
        %1462 = vmatpush1.msra.mxu0 0.0
        %1463 = vmatprep.subr.mxu0 0.0
        %1464 = vmatpush1.msra.mxu0 0.0
        %1465 = vmatprep.subr.mxu0 0.0
        %1466 = vmatpush1.msra.mxu0 0.0
        %1467 = vmatprep.subr.mxu0 0.0
        %1468 = vmatpush1.msra.mxu0 0.0
        %1469 = vmatprep.subr.mxu0 0.0
        %1470 = vmatpush1.msra.mxu0 0.0
        %1471 = vmatprep.subr.mxu0 0.0
        %1472 = vmatpush1.msra.mxu0 0.0
        %1473 = vmatprep.subr.mxu0 0.0
        %1474 = vmatpush1.msra.mxu0 0.0
        %1475 = vmatprep.subr.mxu0 0.0
        %1476 = vmatpush1.msra.mxu0 0.0
        %1477 = vmatprep.subr.mxu0 0.0
        %1478 = vmatpush1.msra.mxu0 0.0
        %1479 = vmatprep.subr.mxu0 0.0
        %1480 = vmatpush1.msra.mxu0 0.0
        %1481 = vmatprep.subr.mxu0 0.0
        %1482 = vmatpush1.msra.mxu0 0.0
        %1483 = vmatprep.subr.mxu0 0.0
        %1484 = vmatpush1.msra.mxu0 0.0
        %1485 = vmatprep.subr.mxu0 0.0
        %1486 = vmatpush1.msra.mxu0 0.0
        %1487 = vmatprep.subr.mxu0 0.0
        %1488 = vmatpush1.msra.mxu0 0.0
        %1489 = vmatprep.subr.mxu0 0.0
        %1490 = vmatpush1.msra.mxu0 0.0
        %1491 = vmatprep.subr.mxu0 0.0
        %1492 = vmatpush1.msra.mxu0 0.0
        %1493 = vmatprep.subr.mxu0 0.0
        %1494 = vmatpush1.msra.mxu0 0.0
        %1495 = vmatprep.subr.mxu0 0.0
        %1496 = vmatpush1.msra.mxu0 0.0
        %1497 = vmatprep.subr.mxu0 0.0
        %1498 = vmatpush1.msra.mxu0 0.0
        %1499 = vmatprep.subr.mxu0 0.0
        %1500 = vmatpush1.msra.mxu0 0.0
        %1501 = vmatprep.subr.mxu0 0.0
        %1502 = vmatpush1.msra.mxu0 0.0
        %1503 = vmatprep.subr.mxu0 0.0
        %1504 = vmatpush1.msra.mxu0 0.0
        %1505 = vmatprep.subr.mxu0 0.0
        %1506 = vmatpush1.msra.mxu0 0.0
        %1507 = vmatprep.subr.mxu0 0.0
        %1508 = vmatpush1.msra.mxu0 0.0
        %1509 = vmatprep.subr.mxu0 0.0
        %1510 = vmatpush1.msra.mxu0 0.0
        %1511 = vmatprep.subr.mxu0 0.0
        %1512 = vmatpush1.msra.mxu0 0.0
        %1513 = vmatprep.subr.mxu0 0.0
        %1514 = vmatpush1.msra.mxu0 0.0
        %1515 = vmatprep.mubr.f32.mxu0 0.0
        %1516 = vmatmul.mubr.f32.gmra.mrb[0].mxu0 %v976
        %v1517 = vpop.f32.mrb[0].mxu0
        %v1518 = vadd.f32 0.0, %v1517
        %v1519 = vpop.f32.mrb[0].mxu0
        %1520 = vdwg.mxu0
        %v1521 = vadd.f32 %v1446, %v1518
        %s1522 = scalar_lea.vmem %s11, 2
        %v1523 = vld [vmem:[%s1522] sm:$0x1]
        %v1525 = vlaneseq
        %v1526 = vshrl.u32 %v1525, 7
        %v1527 = vsub.s32 0, %v1526
        %v1528 = vrot.slane %v1523, %v1527
        %v1530 = vadd.f32 %v1521, %v1528
        %v1531 = vtanh.pop %v1530
        %v1532 = vsub.f32 1.0, %v1062
        %v1533 = vmul.f32 %v1532, %v821
        %v1534 = vmul.f32 %v1062, %v1531
        %v1535 = vadd.f32 %v1533, %v1534
        %vm1536 = vcmask 257024
        %1537 = vst.msk [vmem:[#allocation2] sm:$0xf] %vm1536, %v1535
        %p1538 = scmp.eq.s32.totalorder %s36, 5
        // Predicated region
        $region125: #{tpu_custom_call.1} parent=83 // pred_check
          %p1539 = pneg %p1538
        $region126: #{tpu_custom_call.1} parent=83 // pred_check_branch
          %1541 = sbr.rel (%p1539) target = $region128
        $region127: #{tpu_custom_call.1} parent=83 // pred_region
          %v1542 = vld [vmem:[%s12] sm:$0xff]
          %v1543 = vld [vmem:[%s12 + $0x8] sm:$0xff]
          %v1544 = vld [vmem:[%s12 + $0x10] sm:$0xff]
          %v1545 = vld [vmem:[%s12 + $0x18] sm:$0xff]
          %v1546 = vld [vmem:[%s13] sm:$0x1]
          %v1548 = vlaneseq
          %v1549 = vshrl.u32 %v1548, 7
          %v1550 = vsub.s32 0, %v1549
          %v1551 = vrot.slane %v1546, %v1550
          %v1554 = vsel %vm827, %v1535, 0
          %1556 = vmatprep.subr.mxu0 0.0
          %1557 = vmatpush1.msra.mxu0 %v1542
          %1558 = vmatprep.subr.mxu0 0.0
          %1559 = vmatpush1.msra.mxu0 %v1543
          %1560 = vmatprep.subr.mxu0 0.0
          %1561 = vmatpush1.msra.mxu0 %v1544
          %1562 = vmatprep.subr.mxu0 0.0
          %1563 = vmatpush1.msra.mxu0 %v1545
          %1564 = vmatprep.subr.mxu0 0.0
          %1565 = vmatpush1.msra.mxu0 0.0
          %1566 = vmatprep.subr.mxu0 0.0
          %1567 = vmatpush1.msra.mxu0 0.0
          %1568 = vmatprep.subr.mxu0 0.0
          %1569 = vmatpush1.msra.mxu0 0.0
          %1570 = vmatprep.subr.mxu0 0.0
          %1571 = vmatpush1.msra.mxu0 0.0
          %1572 = vmatprep.subr.mxu0 0.0
          %1573 = vmatpush1.msra.mxu0 0.0
          %1574 = vmatprep.subr.mxu0 0.0
          %1575 = vmatpush1.msra.mxu0 0.0
          %1576 = vmatprep.subr.mxu0 0.0
          %1577 = vmatpush1.msra.mxu0 0.0
          %1578 = vmatprep.subr.mxu0 0.0
          %1579 = vmatpush1.msra.mxu0 0.0
          %1580 = vmatprep.subr.mxu0 0.0
          %1581 = vmatpush1.msra.mxu0 0.0
          %1582 = vmatprep.subr.mxu0 0.0
          %1583 = vmatpush1.msra.mxu0 0.0
          %1584 = vmatprep.subr.mxu0 0.0
          %1585 = vmatpush1.msra.mxu0 0.0
          %1586 = vmatprep.subr.mxu0 0.0
          %1587 = vmatpush1.msra.mxu0 0.0
          %1588 = vmatprep.subr.mxu0 0.0
          %1589 = vmatpush1.msra.mxu0 0.0
          %1590 = vmatprep.subr.mxu0 0.0
          %1591 = vmatpush1.msra.mxu0 0.0
          %1592 = vmatprep.subr.mxu0 0.0
          %1593 = vmatpush1.msra.mxu0 0.0
          %1594 = vmatprep.subr.mxu0 0.0
          %1595 = vmatpush1.msra.mxu0 0.0
          %1596 = vmatprep.subr.mxu0 0.0
          %1597 = vmatpush1.msra.mxu0 0.0
          %1598 = vmatprep.subr.mxu0 0.0
          %1599 = vmatpush1.msra.mxu0 0.0
          %1600 = vmatprep.subr.mxu0 0.0
          %1601 = vmatpush1.msra.mxu0 0.0
          %1602 = vmatprep.subr.mxu0 0.0
          %1603 = vmatpush1.msra.mxu0 0.0
          %1604 = vmatprep.subr.mxu0 0.0
          %1605 = vmatpush1.msra.mxu0 0.0
          %1606 = vmatprep.subr.mxu0 0.0
          %1607 = vmatpush1.msra.mxu0 0.0
          %1608 = vmatprep.subr.mxu0 0.0
          %1609 = vmatpush1.msra.mxu0 0.0
          %1610 = vmatprep.subr.mxu0 0.0
          %1611 = vmatpush1.msra.mxu0 0.0
          %1612 = vmatprep.subr.mxu0 0.0
          %1613 = vmatpush1.msra.mxu0 0.0
          %1614 = vmatprep.subr.mxu0 0.0
          %1615 = vmatpush1.msra.mxu0 0.0
          %1616 = vmatprep.subr.mxu0 0.0
          %1617 = vmatpush1.msra.mxu0 0.0
          %1618 = vmatprep.subr.mxu0 0.0
          %1619 = vmatpush1.msra.mxu0 0.0
          %1620 = vmatprep.mubr.f32.mxu0 0.0
          %1621 = vmatmul.mubr.f32.gmra.mrb[0].mxu0 %v1554
          %v1622 = vpop.f32.mrb[0].mxu0
          %v1623 = vadd.f32 %v1551, %v1622
          %v1624 = vpop.f32.mrb[0].mxu0
          %1625 = vdwg.mxu0
          %v1626 = vtanh.pop %v1623
          %v1627 = vld [vmem:[%s14] sm:$0xff]
          %v1628 = vld [vmem:[%s14 + $0x8] sm:$0xff]
          %v1629 = vld [vmem:[%s14 + $0x10] sm:$0xff]
          %v1630 = vld [vmem:[%s14 + $0x18] sm:$0xff]
          %v1631 = vld [vmem:[%s15] sm:$0x1]
          %v1633 = vlaneseq
          %v1634 = vshrl.u32 %v1633, 7
          %v1635 = vsub.s32 0, %v1634
          %v1636 = vrot.slane %v1631, %v1635
          %v1639 = vsel %vm827, %v1626, 0
          %1641 = vmatprep.subr.mxu0 0.0
          %1642 = vmatpush1.msra.mxu0 %v1627
          %1643 = vmatprep.subr.mxu0 0.0
          %1644 = vmatpush1.msra.mxu0 %v1628
          %1645 = vmatprep.subr.mxu0 0.0
          %1646 = vmatpush1.msra.mxu0 %v1629
          %1647 = vmatprep.subr.mxu0 0.0
          %1648 = vmatpush1.msra.mxu0 %v1630
          %1649 = vmatprep.subr.mxu0 0.0
          %1650 = vmatpush1.msra.mxu0 0.0
          %1651 = vmatprep.subr.mxu0 0.0
          %1652 = vmatpush1.msra.mxu0 0.0
          %1653 = vmatprep.subr.mxu0 0.0
          %1654 = vmatpush1.msra.mxu0 0.0
          %1655 = vmatprep.subr.mxu0 0.0
          %1656 = vmatpush1.msra.mxu0 0.0
          %1657 = vmatprep.subr.mxu0 0.0
          %1658 = vmatpush1.msra.mxu0 0.0
          %1659 = vmatprep.subr.mxu0 0.0
          %1660 = vmatpush1.msra.mxu0 0.0
          %1661 = vmatprep.subr.mxu0 0.0
          %1662 = vmatpush1.msra.mxu0 0.0
          %1663 = vmatprep.subr.mxu0 0.0
          %1664 = vmatpush1.msra.mxu0 0.0
          %1665 = vmatprep.subr.mxu0 0.0
          %1666 = vmatpush1.msra.mxu0 0.0
          %1667 = vmatprep.subr.mxu0 0.0
          %1668 = vmatpush1.msra.mxu0 0.0
          %1669 = vmatprep.subr.mxu0 0.0
          %1670 = vmatpush1.msra.mxu0 0.0
          %1671 = vmatprep.subr.mxu0 0.0
          %1672 = vmatpush1.msra.mxu0 0.0
          %1673 = vmatprep.subr.mxu0 0.0
          %1674 = vmatpush1.msra.mxu0 0.0
          %1675 = vmatprep.subr.mxu0 0.0
          %1676 = vmatpush1.msra.mxu0 0.0
          %1677 = vmatprep.subr.mxu0 0.0
          %1678 = vmatpush1.msra.mxu0 0.0
          %1679 = vmatprep.subr.mxu0 0.0
          %1680 = vmatpush1.msra.mxu0 0.0
          %1681 = vmatprep.subr.mxu0 0.0
          %1682 = vmatpush1.msra.mxu0 0.0
          %1683 = vmatprep.subr.mxu0 0.0
          %1684 = vmatpush1.msra.mxu0 0.0
          %1685 = vmatprep.subr.mxu0 0.0
          %1686 = vmatpush1.msra.mxu0 0.0
          %1687 = vmatprep.subr.mxu0 0.0
          %1688 = vmatpush1.msra.mxu0 0.0
          %1689 = vmatprep.subr.mxu0 0.0
          %1690 = vmatpush1.msra.mxu0 0.0
          %1691 = vmatprep.subr.mxu0 0.0
          %1692 = vmatpush1.msra.mxu0 0.0
          %1693 = vmatprep.subr.mxu0 0.0
          %1694 = vmatpush1.msra.mxu0 0.0
          %1695 = vmatprep.subr.mxu0 0.0
          %1696 = vmatpush1.msra.mxu0 0.0
          %1697 = vmatprep.subr.mxu0 0.0
          %1698 = vmatpush1.msra.mxu0 0.0
          %1699 = vmatprep.subr.mxu0 0.0
          %1700 = vmatpush1.msra.mxu0 0.0
          %1701 = vmatprep.subr.mxu0 0.0
          %1702 = vmatpush1.msra.mxu0 0.0
          %1703 = vmatprep.subr.mxu0 0.0
          %1704 = vmatpush1.msra.mxu0 0.0
          %1705 = vmatprep.mubr.f32.mxu0 0.0
          %1706 = vmatmul.mubr.f32.gmra.mrb[0].mxu0 %v1639
          %v1707 = vpop.f32.mrb[0].mxu0
          %v1708 = vadd.f32 %v1636, %v1707
          %v1709 = vpop.f32.mrb[0].mxu0
          %1710 = vdwg.mxu0
          %vm1711 = vcmask 11264
          %1712 = vst.msk [vmem:[%s16] sm:$0xf] %vm1711, %v1708
        $region128: #{tpu_custom_call.1} parent=83 // pred_fallthru
          _
        // Predicated region
        $region129: #{tpu_custom_call.1} parent=83 // pred_check
          %p1713 = pneg %p405
        $region130: #{tpu_custom_call.1} parent=83 // pred_check_branch
          %1715 = sbr.rel (%p1713) target = $region132
        $region131: #{tpu_custom_call.1} parent=83 // pred_region
          _
        $region132: #{tpu_custom_call.1} parent=83 // pred_fallthru
          _
        // Predicated region
        $region133: #{tpu_custom_call.1} parent=83 // pred_check
          %p1716 = pneg %p405
        $region134: #{tpu_custom_call.1} parent=83 // pred_check_branch
          %1718 = sbr.rel (%p1716) target = $region136
        $region135: #{tpu_custom_call.1} parent=83 // pred_region
          _
        $region136: #{tpu_custom_call.1} parent=83 // pred_fallthru
          _
      $region84: #{tpu_custom_call.1} parent=5 // pred_fallthru
        _
      %p1719 = scmp.le.s32.totalorder 2, %s31
      // Predicated region
      $region137: #{tpu_custom_call.1} parent=5 // pred_check
        %p1720 = pneg %p1719
      $region138: #{tpu_custom_call.1} parent=5 // pred_check_branch
        %1722 = sbr.rel (%p1720) target = $region140
      $region139: #{tpu_custom_call.1} parent=5 // pred_region
        %s1723 = ssub.s32 %s31, 2
      $region140: #{tpu_custom_call.1} parent=5 // pred_fallthru
        _
    $region6: #{tpu_custom_call.1} parent=1 // loop_footer
      %s35 = sadd.s32 1, %s31
    $region7: #{tpu_custom_call.1} parent=1 // loop_footer_branch
      %30 = sbr.rel target = $region3
    $region8: #{tpu_custom_call.1} parent=1 // loop_exit
      _
    %1724 = vsyncpa [#allocation4], 1
    %s1725 = scalar_lea.sflag [#allocation4], 1
    %1726 = vsyncpa %s1725, 1
    %1727 = vsyncpa [#allocation6], 1
    %s1728 = scalar_lea.sflag [#allocation6], 1
    %1729 = vsyncpa %s1728, 1
    %1730 = vsyncpa [#allocation9], 1
    %1731 = vsyncpa [#allocation12], 1
    %1732 = vsyncpa [#allocation15], 1

</llo_original>
